<compile_context>
chip_gen: v6e
topology: v6e:2x2x1
jax: 0.10.0
libtpu: 0.0.40
codegen_flags: <defaults>
</compile_context>

<pallas_src>
import jax
import jax.numpy as jnp
from jax.experimental import pallas as pl
from jax.experimental.pallas import tpu as pltpu
from jax.scipy.linalg import block_diag

SLOPE = 0.2  # LeakyReLU negative slope used by NLayerLeakyMLP


def _npstateprior_kernel(zin_ref, w0_ref, w1_ref, w2_ref, w3_ref, vecs_ref,
                         out_ref, slab_ref):
    # Per grid step (one tile of tn samples, ALL components at once):
    #   zin_ref : (latent + I, tn)  rows [z ; x_0 .. x_{I-1}], samples on lanes
    #   w0_ref  : (I*H, latent + I) packed layer-0 weight (masks folded in)
    #   w1_ref  : (I*H, I*H)        block-diagonal layer-1 weight
    #   w2_ref  : (I*H, I*H)        block-diagonal layer-2 weight
    #   w3_ref  : (I, I*H)          block-row output weight
    #   vecs_ref: (I*H, 5) f32      cols [w0x, b0, b1, b2, b3 (first I rows)]
    #   out_ref : (2*I, tn)         rows [residual_i ... ; log|dg_i/dx_i| ...]
    #   slab_ref: (I*H, 2*tn)       scratch: [activation | tangent] slab
    f32 = jnp.float32
    tn = out_ref.shape[-1]
    I = out_ref.shape[0] // 2
    mm = slab_ref.dtype

    vecs = vecs_ref[...]                      # (I*H, 5)
    w0x = vecs[:, 0:1]                        # d(layer-0 pre)/d x_i, per row
    b0 = vecs[:, 1:2]
    b1 = vecs[:, 2:3]
    b2 = vecs[:, 3:4]
    b3 = vecs[0:I, 4:5]                       # (I, 1)

    # layer 0: Linear + LeakyReLU.  x_i is folded into the matmul via its own
    # input column, so one (I*H, latent+I) @ (latent+I, tn) push does it all.
    pre = jnp.dot(w0_ref[...], zin_ref[...], preferred_element_type=f32) + b0
    gate = jnp.where(pre > 0, f32(1.0), f32(SLOPE))
    slab_ref[:, :tn] = (pre * gate).astype(mm)          # activation half
    slab_ref[:, tn:] = (gate * w0x).astype(mm)          # tangent half (d/dx_i)

    # layers 1 & 2: fused act+tangent matmul on the (I*H, 2*tn) slab.
    for w_ref, b in ((w1_ref, b1), (w2_ref, b2)):
        h = jnp.dot(w_ref[...], slab_ref[...], preferred_element_type=f32)
        pre = h[:, :tn] + b
        gate = jnp.where(pre > 0, f32(1.0), f32(SLOPE))
        slab_ref[:, :tn] = (pre * gate).astype(mm)
        slab_ref[:, tn:] = (h[:, tn:] * gate).astype(mm)

    # output layer: block-row (I, I*H) @ (I*H, 2*tn) -> all components at once.
    o = jnp.dot(w3_ref[...], slab_ref[...], preferred_element_type=f32)  # (I, 2*tn)
    out_ref[0:I, :] = o[:, :tn] + b3
    out_ref[I:, :] = jnp.log(jnp.abs(o[:, tn:]))


def init_params(key, latent_size, input_dim, hidden_dim):
    """Deterministic synthetic weights (torch-like layout, x @ W convention)."""
    d_in = latent_size + 1
    ks = jax.random.split(key, 8)

    def u(k, shape, fan_in):
        bound = 1.0 / jnp.sqrt(fan_in)
        return jax.random.uniform(k, shape, jnp.float32, -bound, bound)

    w0 = u(ks[0], (input_dim, d_in, hidden_dim), d_in)
    b0 = u(ks[1], (input_dim, 1, hidden_dim), d_in)
    w1 = u(ks[2], (input_dim, hidden_dim, hidden_dim), hidden_dim)
    b1 = u(ks[3], (input_dim, 1, hidden_dim), hidden_dim)
    w2 = u(ks[4], (input_dim, hidden_dim, hidden_dim), hidden_dim)
    b2 = u(ks[5], (input_dim, 1, hidden_dim), hidden_dim)
    w3 = u(ks[6], (input_dim, hidden_dim, 1), hidden_dim)
    b3 = u(ks[7], (input_dim, 1, 1), hidden_dim)
    return (w0, b0, w1, b1, w2, b2, w3, b3)


def _pack_params(params, masks, matmul_dtype):
    """Pack the per-component MLPs into one block-structured network."""
    w0, b0, w1, b1, w2, b2, w3, b3 = params
    I, d_in, H = w0.shape
    latent = d_in - 1
    Din = latent + I
    f32 = jnp.float32

    w0t = jnp.transpose(w0, (0, 2, 1))                    # (I, H, d_in)
    w0z = w0t[:, :, :latent]                              # (I, H, latent)
    if masks is not None:                                 # W @ (m*z) == (W*m) @ z
        w0z = w0z * jnp.asarray(masks, f32)[:, None, :]
    w0x = w0t[:, :, latent]                               # (I, H)

    # layer-0 packed: rows i*H:(i+1)*H handle component i; x_i arrives on
    # input column latent+i.
    rows = []
    for i in range(I):
        blk = jnp.zeros((H, Din), f32)
        blk = blk.at[:, :latent].set(w0z[i])
        blk = blk.at[:, latent + i].set(w0x[i])
        rows.append(blk)
    W0p = jnp.concatenate(rows, axis=0)                   # (I*H, latent+I)

    W1p = block_diag(*[jnp.transpose(w1[i]) for i in range(I)])   # (I*H, I*H)
    W2p = block_diag(*[jnp.transpose(w2[i]) for i in range(I)])   # (I*H, I*H)
    W3p = block_diag(*[jnp.transpose(w3[i]) for i in range(I)])   # (I, I*H)

    IH = I * H
    b3col = jnp.zeros((IH,), f32).at[:I].set(b3[:, 0, 0])
    vecs = jnp.stack([w0x.reshape(IH), b0[:, 0, :].reshape(IH),
                      b1[:, 0, :].reshape(IH), b2[:, 0, :].reshape(IH),
                      b3col], axis=1)                     # (I*H, 5)

    mm = matmul_dtype
    return (W0p.astype(mm), W1p.astype(mm), W2p.astype(mm), W3p.astype(mm),
            vecs.astype(f32), H)


def _round_up(a, m):
    return (a + m - 1) // m * m


def np_state_prior_forward(z, xs, params, masks=None, *, tile_n=4096,
                           matmul_dtype=jnp.float32):
    """z: (B,T,latent), xs: (B,T,input_dim) -> (residuals, sum_log_abs_det_jacobian).

    matmul_dtype=jnp.bfloat16 casts the MXU operands (weights + slab) to bf16
    for the native-bf16 MXUs on v5e/v6e/v7x; all accumulation and the
    gate/log|J| math stay f32.
    """
    B, T, latent = z.shape
    I = xs.shape[-1]
    N = B * T
    W0p, W1p, W2p, W3p, vecs, H = _pack_params(params, masks, matmul_dtype)
    IH = I * H
    Din = latent + I

    # Lane-dense sample tiling; padded lanes are sliced away *before* any
    # reduction (they can hold log(|garbage|), even -inf).
    tn = min(tile_n, _round_up(N, 128))
    Np = _round_up(N, tn)
    n_tiles = Np // tn
    pad = Np - N

    z_t = jnp.transpose(z.reshape(N, latent)).astype(jnp.float32)   # (latent, N)
    x_t = jnp.transpose(xs.reshape(N, I)).astype(jnp.float32)       # (I, N)
    zin = jnp.concatenate([z_t, x_t], axis=0)                       # (Din, N)
    zin = jnp.pad(zin, ((0, 0), (0, pad))).astype(matmul_dtype)     # (Din, Np)

    flops = 2 * Np * IH * Din + 8 * Np * IH * IH + 4 * Np * I * IH
    w_bytes = sum(int(a.size) * a.dtype.itemsize
                  for a in (W0p, W1p, W2p, W3p, vecs))
    bytes_accessed = (int(zin.size) * zin.dtype.itemsize
                      + 2 * I * Np * 4 + n_tiles * w_bytes)

    out = pl.pallas_call(
        _npstateprior_kernel,
        out_shape=jax.ShapeDtypeStruct((2 * I, Np), jnp.float32),
        grid_spec=pltpu.PrefetchScalarGridSpec(
            num_scalar_prefetch=0,
            grid=(n_tiles,),
            in_specs=[
                pl.BlockSpec((Din, tn), lambda n: (0, n)),   # [z ; x] tile
                pl.BlockSpec((IH, Din), lambda n: (0, 0)),   # W0 (grid-invariant)
                pl.BlockSpec((IH, IH), lambda n: (0, 0)),    # W1 block-diag
                pl.BlockSpec((IH, IH), lambda n: (0, 0)),    # W2 block-diag
                pl.BlockSpec((I, IH), lambda n: (0, 0)),     # W3 block-row
                pl.BlockSpec((IH, 5), lambda n: (0, 0)),     # packed vectors
            ],
            out_specs=pl.BlockSpec((2 * I, tn), lambda n: (0, n)),
            scratch_shapes=[pltpu.VMEM((IH, 2 * tn), matmul_dtype)],
        ),
        compiler_params=pltpu.CompilerParams(
            dimension_semantics=("parallel",),
            vmem_limit_bytes=48 << 20),
        cost_estimate=pl.CostEstimate(
            flops=int(flops),
            transcendentals=int(I * Np),
            bytes_accessed=int(bytes_accessed)),
    )(zin, W0p, W1p, W2p, W3p, vecs)

    # Slice off padded lanes BEFORE reducing (padded jac lanes may be -inf).
    res = out[:I, :N]                                      # (I, N)
    jac = out[I:, :N]                                      # (I, N)
    residuals = jnp.transpose(res).reshape(B, T, I)        # tiny post-transpose
    sum_lad = jnp.sum(jac, axis=0).reshape(B, T).sum(axis=-1)
    return residuals, sum_lad


# ------------------------- pure-JAX reference ------------------------------ #
def _mlp_single(pi, v):
    w0, b0, w1, b1, w2, b2, w3, b3 = pi
    h = jnp.dot(v, w0) + b0[0]
    h = jnp.where(h > 0, h, SLOPE * h)
    h = jnp.dot(h, w1) + b1[0]
    h = jnp.where(h > 0, h, SLOPE * h)
    h = jnp.dot(h, w2) + b2[0]
    h = jnp.where(h > 0, h, SLOPE * h)
    return jnp.dot(h, w3) + b3[0]


def reference_forward(z, xs, params):
    B, T, latent = z.shape
    input_dim = xs.shape[-1]
    N = B * T
    yy = z.reshape(N, latent)
    xx = xs.reshape(N, input_dim)
    residuals, slad = [], 0.0
    for i in range(input_dim):
        pi = tuple(p[i] for p in params)
        f = lambda v: _mlp_single(pi, v)
        inp = jnp.concatenate([yy, xx[:, i:i + 1]], axis=-1)
        residuals.append(jax.vmap(f)(inp))
        pdd = jax.vmap(jax.jacfwd(f))(inp)          # (N, 1, latent+1)
        slad = slad + jnp.log(jnp.abs(pdd[:, 0, -1]))
    residuals = jnp.concatenate(residuals, axis=-1).reshape(B, T, input_dim)
    slad = jnp.sum(slad.reshape(B, T), axis=1)
    return residuals, slad


if __name__ == "__main__":
    # Module hyper-params (lags only sets self.L and is unused in forward).
    lags, latent_size, input_dim, num_layers, hidden_dim = 1, 8, 4, 3, 32
    B, T = 2, 8

    key = jax.random.PRNGKey(0)
    kz, kx, kp = jax.random.split(key, 3)
    z = jax.random.normal(kz, (B, T, latent_size), jnp.float32)
    xs = jax.random.normal(kx, (B, T, input_dim), jnp.float32)
    params = init_params(kp, latent_size, input_dim, hidden_dim)

    fwd = jax.jit(np_state_prior_forward,
                  static_argnames=("tile_n", "matmul_dtype"))

    # f32 MXU-operand path: exact validation against the jacfwd reference.
    residuals, slad = jax.block_until_ready(fwd(z, xs, params))
    ref_res, ref_slad = reference_forward(z, xs, params)
    assert residuals.shape == (B, T, input_dim) and slad.shape == (B,)
    assert jnp.allclose(residuals, ref_res, rtol=1e-2, atol=1e-2)
    assert jnp.allclose(slad, ref_slad, rtol=1e-2, atol=5e-2)

    # bf16 MXU-operand path (per perf review): mantissa-only loss on the
    # log|J| path, so validate residuals tightly and slad with looser bounds.
    res_bf16, slad_bf16 = jax.block_until_ready(
        fwd(z, xs, params, matmul_dtype=jnp.bfloat16))
    assert jnp.allclose(res_bf16, ref_res, rtol=5e-2, atol=5e-2)
    assert bool(jnp.all(jnp.isfinite(slad_bf16)))
    assert jnp.allclose(slad_bf16, ref_slad, rtol=5e-2, atol=0.5)

    print("KERNEL_OK")
</pallas_src>

<mosaic_0001>
module attributes {stable_mosaic.version = 11 : i64} {
  func.func @_npstateprior_kernel(%arg0: i32, %arg1: memref<12x128xf32, #tpu.memory_space<vmem>>, %arg2: memref<128x12xf32, #tpu.memory_space<vmem>>, %arg3: memref<128x128xf32, #tpu.memory_space<vmem>>, %arg4: memref<128x128xf32, #tpu.memory_space<vmem>>, %arg5: memref<4x128xf32, #tpu.memory_space<vmem>>, %arg6: memref<128x5xf32, #tpu.memory_space<vmem>>, %arg7: memref<8x128xf32, #tpu.memory_space<vmem>>, %arg8: memref<128x256xf32, #tpu.memory_space<vmem>>) attributes {dimension_semantics = [#tpu.dimension_semantics<parallel>], iteration_bounds = array<i64: 1>, scalar_prefetch = 0 : i64, scratch_operands = 1 : i64, tpu.core_type = #tpu.core_type<tc>, window_params = [{transform_indices = @transform_0, window_bounds = array<i64: 12, 128>}, {pipeline_mode = #tpu.pipeline_mode<synchronous>, transform_indices = @transform_1, window_bounds = array<i64: 128, 12>}, {pipeline_mode = #tpu.pipeline_mode<synchronous>, transform_indices = @transform_2, window_bounds = array<i64: 128, 128>}, {pipeline_mode = #tpu.pipeline_mode<synchronous>, transform_indices = @transform_3, window_bounds = array<i64: 128, 128>}, {pipeline_mode = #tpu.pipeline_mode<synchronous>, transform_indices = @transform_4, window_bounds = array<i64: 4, 128>}, {pipeline_mode = #tpu.pipeline_mode<synchronous>, transform_indices = @transform_5, window_bounds = array<i64: 128, 5>}, {transform_indices = @transform_6, window_bounds = array<i64: 8, 128>}]} {
    %c0 = arith.constant 0 : index
    %c0_0 = arith.constant 0 : index
    %0 = vector.load %arg6[%c0, %c0_0] : memref<128x5xf32, #tpu.memory_space<vmem>>, vector<128x5xf32>
    %1 = vector.extract_strided_slice %0 {offsets = [0, 0], sizes = [128, 1], strides = [1, 1]} : vector<128x5xf32> to vector<128x1xf32>
    %2 = vector.extract_strided_slice %0 {offsets = [0, 1], sizes = [128, 1], strides = [1, 1]} : vector<128x5xf32> to vector<128x1xf32>
    %3 = vector.extract_strided_slice %0 {offsets = [0, 2], sizes = [128, 1], strides = [1, 1]} : vector<128x5xf32> to vector<128x1xf32>
    %4 = vector.extract_strided_slice %0 {offsets = [0, 3], sizes = [128, 1], strides = [1, 1]} : vector<128x5xf32> to vector<128x1xf32>
    %5 = vector.extract_strided_slice %0 {offsets = [0, 4], sizes = [4, 1], strides = [1, 1]} : vector<128x5xf32> to vector<4x1xf32>
    %c0_1 = arith.constant 0 : index
    %c0_2 = arith.constant 0 : index
    %6 = vector.load %arg2[%c0_1, %c0_2] : memref<128x12xf32, #tpu.memory_space<vmem>>, vector<128x12xf32>
    %c0_3 = arith.constant 0 : index
    %c0_4 = arith.constant 0 : index
    %7 = vector.load %arg1[%c0_3, %c0_4] : memref<12x128xf32, #tpu.memory_space<vmem>>, vector<12x128xf32>
    %cst = arith.constant dense<0.000000e+00> : vector<128x128xf32>
    %8 = tpu.matmul %6, %7, %cst {dimension_numbers = #tpu.dot_dimension_numbers<[1], [0], [0], [1], [0, 0, 1, 1], [], []>} : vector<128x12xf32>, vector<12x128xf32>, vector<128x128xf32> -> vector<128x128xf32>
    %9 = vector.broadcast %2 : vector<128x1xf32> to vector<128x128xf32>
    %10 = arith.addf %8, %9 : vector<128x128xf32>
    %cst_5 = arith.constant 0.000000e+00 : f32
    %11 = vector.broadcast %cst_5 : f32 to vector<128x128xf32>
    %12 = arith.cmpf ogt, %10, %11 : vector<128x128xf32>
    %cst_6 = arith.constant 1.000000e+00 : f32
    %cst_7 = arith.constant 2.000000e-01 : f32
    %13 = vector.broadcast %cst_6 : f32 to vector<128x128xf32>
    %14 = vector.broadcast %cst_7 : f32 to vector<128x128xf32>
    %15 = arith.select %12, %13, %14 : vector<128x128xi1>, vector<128x128xf32>
    %16 = arith.mulf %10, %15 : vector<128x128xf32>
    %c0_8 = arith.constant 0 : index
    %c0_9 = arith.constant 0 : index
    %17 = vector.load %arg8[%c0_8, %c0_9] : memref<128x256xf32, #tpu.memory_space<vmem>>, vector<128x128xf32>
    tpu.vector_store %arg8[%c0_8, %c0_9], %16 {strides = array<i32>} : memref<128x256xf32, #tpu.memory_space<vmem>>, vector<128x128xf32>,
    %18 = vector.broadcast %1 : vector<128x1xf32> to vector<128x128xf32>
    %19 = arith.mulf %15, %18 : vector<128x128xf32>
    %c0_10 = arith.constant 0 : index
    %c128 = arith.constant 128 : index
    %20 = vector.load %arg8[%c0_10, %c128] : memref<128x256xf32, #tpu.memory_space<vmem>>, vector<128x128xf32>
    tpu.vector_store %arg8[%c0_10, %c128], %19 {strides = array<i32>} : memref<128x256xf32, #tpu.memory_space<vmem>>, vector<128x128xf32>,
    %c0_11 = arith.constant 0 : index
    %c0_12 = arith.constant 0 : index
    %21 = vector.load %arg3[%c0_11, %c0_12] : memref<128x128xf32, #tpu.memory_space<vmem>>, vector<128x128xf32>
    %c0_13 = arith.constant 0 : index
    %c0_14 = arith.constant 0 : index
    %22 = vector.load %arg8[%c0_13, %c0_14] : memref<128x256xf32, #tpu.memory_space<vmem>>, vector<128x256xf32>
    %cst_15 = arith.constant dense<0.000000e+00> : vector<128x256xf32>
    %23 = tpu.matmul %21, %22, %cst_15 {dimension_numbers = #tpu.dot_dimension_numbers<[1], [0], [0], [1], [0, 0, 1, 1], [], []>} : vector<128x128xf32>, vector<128x256xf32>, vector<128x256xf32> -> vector<128x256xf32>
    %24 = vector.extract_strided_slice %23 {offsets = [0, 0], sizes = [128, 128], strides = [1, 1]} : vector<128x256xf32> to vector<128x128xf32>
    %25 = vector.broadcast %3 : vector<128x1xf32> to vector<128x128xf32>
    %26 = arith.addf %24, %25 : vector<128x128xf32>
    %cst_16 = arith.constant 0.000000e+00 : f32
    %27 = vector.broadcast %cst_16 : f32 to vector<128x128xf32>
    %28 = arith.cmpf ogt, %26, %27 : vector<128x128xf32>
    %cst_17 = arith.constant 1.000000e+00 : f32
    %cst_18 = arith.constant 2.000000e-01 : f32
    %29 = vector.broadcast %cst_17 : f32 to vector<128x128xf32>
    %30 = vector.broadcast %cst_18 : f32 to vector<128x128xf32>
    %31 = arith.select %28, %29, %30 : vector<128x128xi1>, vector<128x128xf32>
    %32 = arith.mulf %26, %31 : vector<128x128xf32>
    %c0_19 = arith.constant 0 : index
    %c0_20 = arith.constant 0 : index
    %33 = vector.load %arg8[%c0_19, %c0_20] : memref<128x256xf32, #tpu.memory_space<vmem>>, vector<128x128xf32>
    tpu.vector_store %arg8[%c0_19, %c0_20], %32 {strides = array<i32>} : memref<128x256xf32, #tpu.memory_space<vmem>>, vector<128x128xf32>,
    %34 = vector.extract_strided_slice %23 {offsets = [0, 128], sizes = [128, 128], strides = [1, 1]} : vector<128x256xf32> to vector<128x128xf32>
    %35 = arith.mulf %34, %31 : vector<128x128xf32>
    %c0_21 = arith.constant 0 : index
    %c128_22 = arith.constant 128 : index
    %36 = vector.load %arg8[%c0_21, %c128_22] : memref<128x256xf32, #tpu.memory_space<vmem>>, vector<128x128xf32>
    tpu.vector_store %arg8[%c0_21, %c128_22], %35 {strides = array<i32>} : memref<128x256xf32, #tpu.memory_space<vmem>>, vector<128x128xf32>,
    %c0_23 = arith.constant 0 : index
    %c0_24 = arith.constant 0 : index
    %37 = vector.load %arg4[%c0_23, %c0_24] : memref<128x128xf32, #tpu.memory_space<vmem>>, vector<128x128xf32>
    %c0_25 = arith.constant 0 : index
    %c0_26 = arith.constant 0 : index
    %38 = vector.load %arg8[%c0_25, %c0_26] : memref<128x256xf32, #tpu.memory_space<vmem>>, vector<128x256xf32>
    %cst_27 = arith.constant dense<0.000000e+00> : vector<128x256xf32>
    %39 = tpu.matmul %37, %38, %cst_27 {dimension_numbers = #tpu.dot_dimension_numbers<[1], [0], [0], [1], [0, 0, 1, 1], [], []>} : vector<128x128xf32>, vector<128x256xf32>, vector<128x256xf32> -> vector<128x256xf32>
    %40 = vector.extract_strided_slice %39 {offsets = [0, 0], sizes = [128, 128], strides = [1, 1]} : vector<128x256xf32> to vector<128x128xf32>
    %41 = vector.broadcast %4 : vector<128x1xf32> to vector<128x128xf32>
    %42 = arith.addf %40, %41 : vector<128x128xf32>
    %cst_28 = arith.constant 0.000000e+00 : f32
    %43 = vector.broadcast %cst_28 : f32 to vector<128x128xf32>
    %44 = arith.cmpf ogt, %42, %43 : vector<128x128xf32>
    %cst_29 = arith.constant 1.000000e+00 : f32
    %cst_30 = arith.constant 2.000000e-01 : f32
    %45 = vector.broadcast %cst_29 : f32 to vector<128x128xf32>
    %46 = vector.broadcast %cst_30 : f32 to vector<128x128xf32>
    %47 = arith.select %44, %45, %46 : vector<128x128xi1>, vector<128x128xf32>
    %48 = arith.mulf %42, %47 : vector<128x128xf32>
    %c0_31 = arith.constant 0 : index
    %c0_32 = arith.constant 0 : index
    %49 = vector.load %arg8[%c0_31, %c0_32] : memref<128x256xf32, #tpu.memory_space<vmem>>, vector<128x128xf32>
    tpu.vector_store %arg8[%c0_31, %c0_32], %48 {strides = array<i32>} : memref<128x256xf32, #tpu.memory_space<vmem>>, vector<128x128xf32>,
    %50 = vector.extract_strided_slice %39 {offsets = [0, 128], sizes = [128, 128], strides = [1, 1]} : vector<128x256xf32> to vector<128x128xf32>
    %51 = arith.mulf %50, %47 : vector<128x128xf32>
    %c0_33 = arith.constant 0 : index
    %c128_34 = arith.constant 128 : index
    %52 = vector.load %arg8[%c0_33, %c128_34] : memref<128x256xf32, #tpu.memory_space<vmem>>, vector<128x128xf32>
    tpu.vector_store %arg8[%c0_33, %c128_34], %51 {strides = array<i32>} : memref<128x256xf32, #tpu.memory_space<vmem>>, vector<128x128xf32>,
    %c0_35 = arith.constant 0 : index
    %c0_36 = arith.constant 0 : index
    %53 = vector.load %arg5[%c0_35, %c0_36] : memref<4x128xf32, #tpu.memory_space<vmem>>, vector<4x128xf32>
    %c0_37 = arith.constant 0 : index
    %c0_38 = arith.constant 0 : index
    %54 = vector.load %arg8[%c0_37, %c0_38] : memref<128x256xf32, #tpu.memory_space<vmem>>, vector<128x256xf32>
    %cst_39 = arith.constant dense<0.000000e+00> : vector<4x256xf32>
    %55 = tpu.matmul %53, %54, %cst_39 {dimension_numbers = #tpu.dot_dimension_numbers<[1], [0], [0], [1], [0, 0, 1, 1], [], []>} : vector<4x128xf32>, vector<128x256xf32>, vector<4x256xf32> -> vector<4x256xf32>
    %56 = vector.extract_strided_slice %55 {offsets = [0, 0], sizes = [4, 128], strides = [1, 1]} : vector<4x256xf32> to vector<4x128xf32>
    %57 = vector.broadcast %5 : vector<4x1xf32> to vector<4x128xf32>
    %58 = arith.addf %56, %57 : vector<4x128xf32>
    %c0_40 = arith.constant 0 : index
    %c0_41 = arith.constant 0 : index
    %59 = vector.load %arg7[%c0_40, %c0_41] : memref<8x128xf32, #tpu.memory_space<vmem>>, vector<4x128xf32>
    tpu.vector_store %arg7[%c0_40, %c0_41], %58 {strides = array<i32>} : memref<8x128xf32, #tpu.memory_space<vmem>>, vector<4x128xf32>,
    %60 = vector.extract_strided_slice %55 {offsets = [0, 128], sizes = [4, 128], strides = [1, 1]} : vector<4x256xf32> to vector<4x128xf32>
    %61 = math.absf %60 : vector<4x128xf32>
    %62 = math.log %61 : vector<4x128xf32>
    %c4 = arith.constant 4 : index
    %c0_42 = arith.constant 0 : index
    %63 = vector.load %arg7[%c4, %c0_42] : memref<8x128xf32, #tpu.memory_space<vmem>>, vector<4x128xf32>
    tpu.vector_store %arg7[%c4, %c0_42], %62 {strides = array<i32>} : memref<8x128xf32, #tpu.memory_space<vmem>>, vector<4x128xf32>,
    return
  }
  func.func @transform_0(%arg0: i32) -> (i32, i32) {
    %c0_i32 = arith.constant 0 : i32
    %c0_i32_0 = arith.constant 0 : i32
    return %c0_i32, %arg0 : i32, i32
  }
  func.func @transform_1(%arg0: i32) -> (i32, i32) {
    %c0_i32 = arith.constant 0 : i32
    %c0_i32_0 = arith.constant 0 : i32
    %c0_i32_1 = arith.constant 0 : i32
    return %c0_i32, %c0_i32_0 : i32, i32
  }
  func.func @transform_2(%arg0: i32) -> (i32, i32) {
    %c0_i32 = arith.constant 0 : i32
    %c0_i32_0 = arith.constant 0 : i32
    %c0_i32_1 = arith.constant 0 : i32
    return %c0_i32, %c0_i32_0 : i32, i32
  }
  func.func @transform_3(%arg0: i32) -> (i32, i32) {
    %c0_i32 = arith.constant 0 : i32
    %c0_i32_0 = arith.constant 0 : i32
    %c0_i32_1 = arith.constant 0 : i32
    return %c0_i32, %c0_i32_0 : i32, i32
  }
  func.func @transform_4(%arg0: i32) -> (i32, i32) {
    %c0_i32 = arith.constant 0 : i32
    %c0_i32_0 = arith.constant 0 : i32
    %c0_i32_1 = arith.constant 0 : i32
    return %c0_i32, %c0_i32_0 : i32, i32
  }
  func.func @transform_5(%arg0: i32) -> (i32, i32) {
    %c0_i32 = arith.constant 0 : i32
    %c0_i32_0 = arith.constant 0 : i32
    %c0_i32_1 = arith.constant 0 : i32
    return %c0_i32, %c0_i32_0 : i32, i32
  }
  func.func @transform_6(%arg0: i32) -> (i32, i32) {
    %c0_i32 = arith.constant 0 : i32
    %c0_i32_0 = arith.constant 0 : i32
    return %c0_i32, %arg0 : i32, i32
  }
}

</mosaic_0001>

<llo_original>
// kernel: squeeze.48
$region0: #{squeeze.48}
  %s0 = inlined_call_operand.vmem [shape: f32[4,32], index: 0, kind: input, shape index: {}]
  %s1 = inlined_call_operand.vmem [shape: f32[128,1], index: 1, kind: output, shape index: {}]
  $region1: #{squeeze.48} parent=0
    #allocation0 [shape = 'u8[4096]{0}', space=vmem, size = 0x1000, scoped, tag = 'scoped mem for output reshape']
    #allocation1 [shape = 'u8[4096]{0}', space=vmem, size = 0x1000, scoped, tag = 'scoped mem for input reshape']
    %s3 = sshll.u32 1, 4
    %s4 = ssub.s32 %s3, 1
    %v5 = vld [vmem:[%s0] sm:%s4]
    %6 = vst [vmem:[#allocation1] sm:%s4] %v5
    %v7 = vld [vmem:[#allocation1] sm:$0x1]
    %vm8 = vcmask 261120
    %9 = vst.msk [vmem:[#allocation0] sm:$0x1] %vm8, %v7
    %s10 = scalar_lea.vmem [#allocation1], 3
    %v11 = vld [vmem:[%s10] sm:$0x1]
    %12 = vrot.lane.b32.xlu0 %v11, 96
    %v13 = vpop.permute.xlu0 %12
    %vm14 = vcmask 1048320
    %15 = vst.msk [vmem:[#allocation0] sm:$0x1] %vm14, %v13
    %s16 = scalar_lea.vmem [#allocation1], 2
    %v17 = vld [vmem:[%s16] sm:$0x1]
    %18 = vrot.lane.b32.xlu0 %v17, 64
    %v19 = vpop.permute.xlu0 %18
    %vm20 = vcmask 785920
    %21 = vst.msk [vmem:[#allocation0] sm:$0x1] %vm20, %v19
    %s22 = scalar_lea.vmem [#allocation1], 1
    %v23 = vld [vmem:[%s22] sm:$0x1]
    %24 = vrot.lane.b32.xlu0 %v23, 32
    %v25 = vpop.permute.xlu0 %24
    %vm26 = vcmask 523520
    %27 = vst.msk [vmem:[#allocation0] sm:$0x1] %vm26, %v25
    %s29 = sshll.u32 1, 1
    %s30 = ssub.s32 %s29, 1
    %v32 = vld [vmem:[#allocation0] sm:%s30]
    %s33 = sshll.u32 1, 1
    %s34 = ssub.s32 %s33, 1
    %35 = vst [vmem:[%s1] sm:%s34] %v32

// kernel: np_state_prior_forward.1
$region0: #{np_state_prior_forward.1}
  #allocation0 [shape = 'u32[]', space=smem, size = 0x4, offset = 0x4, fixed_abs, tag = 'smem constant byte address 0x4 - core index']
  #allocation1 [shape = 'u32[144,128]{1,0:T(1,128)}', space=vmem, size = 0x12000, scoped, tag = 'internal scratch']
  #allocation2 [shape = 'f32[128,256]{1,0:T(8,128)}', space=vmem, size = 0x20000, scoped, tag = 'scratch operand']
  %s0 = inlined_call_operand.vmem [shape: f32[12,128], index: 0, kind: input, shape index: {}]
  %s1 = inlined_call_operand.vmem [shape: f32[128,12], index: 1, kind: input, shape index: {}]
  %s2 = inlined_call_operand.vmem [shape: f32[128,128], index: 2, kind: input, shape index: {}]
  %s3 = inlined_call_operand.vmem [shape: f32[128,128], index: 3, kind: input, shape index: {}]
  %s4 = inlined_call_operand.vmem [shape: f32[4,128], index: 4, kind: input, shape index: {}]
  %s5 = inlined_call_operand.vmem [shape: f32[128,5], index: 5, kind: input, shape index: {}]
  %s6 = inlined_call_operand.vmem [shape: f32[8,128], index: 6, kind: output, shape index: {}]
  %s7 = sld [smem:[#allocation0]]
  $region34: #{np_state_prior_forward.1} parent=0
    _
  %s9 = ssub.s32 1, %s7
  %s10 = scalar_select 0, %s9, %s7
  // Predicated region
  $region2: #{np_state_prior_forward.1} parent=0 // pred_check
    _
  $region3: #{np_state_prior_forward.1} parent=0 // pred_check_branch
    %12 = sbr.rel (0) target = $region5
  $region4: #{np_state_prior_forward.1} parent=0 // pred_region
    _
  $region5: #{np_state_prior_forward.1} parent=0 // pred_fallthru
    _
  // Predicated region
  $region6: #{np_state_prior_forward.1} parent=0 // pred_check
    _
  $region7: #{np_state_prior_forward.1} parent=0 // pred_check_branch
    %14 = sbr.rel (0) target = $region9
  $region8: #{np_state_prior_forward.1} parent=0 // pred_region
    _
  $region9: #{np_state_prior_forward.1} parent=0 // pred_fallthru
    _
  // Predicated region
  $region10: #{np_state_prior_forward.1} parent=0 // pred_check
    _
  $region11: #{np_state_prior_forward.1} parent=0 // pred_check_branch
    %16 = sbr.rel (0) target = $region13
  $region12: #{np_state_prior_forward.1} parent=0 // pred_region
    _
  $region13: #{np_state_prior_forward.1} parent=0 // pred_fallthru
    _
  // Predicated region
  $region14: #{np_state_prior_forward.1} parent=0 // pred_check
    _
  $region15: #{np_state_prior_forward.1} parent=0 // pred_check_branch
    %18 = sbr.rel (0) target = $region17
  $region16: #{np_state_prior_forward.1} parent=0 // pred_region
    _
  $region17: #{np_state_prior_forward.1} parent=0 // pred_fallthru
    _
  // Predicated region
  $region18: #{np_state_prior_forward.1} parent=0 // pred_check
    _
  $region19: #{np_state_prior_forward.1} parent=0 // pred_check_branch
    %20 = sbr.rel (0) target = $region21
  $region20: #{np_state_prior_forward.1} parent=0 // pred_region
    _
  $region21: #{np_state_prior_forward.1} parent=0 // pred_fallthru
    _
  // Predicated region
  $region22: #{np_state_prior_forward.1} parent=0 // pred_check
    _
  $region23: #{np_state_prior_forward.1} parent=0 // pred_check_branch
    %22 = sbr.rel (0) target = $region25
  $region24: #{np_state_prior_forward.1} parent=0 // pred_region
    _
  $region25: #{np_state_prior_forward.1} parent=0 // pred_fallthru
    _
  %v23 = vld [vmem:[%s5] sm:$0xff]
  %v24 = vld [vmem:[%s5 + $0x8] sm:$0xff]
  %v25 = vld [vmem:[%s5 + $0x10] sm:$0xff]
  %v26 = vld [vmem:[%s5 + $0x18] sm:$0xff]
  %v27 = vld [vmem:[%s5 + $0x20] sm:$0xff]
  %v28 = vld [vmem:[%s5 + $0x28] sm:$0xff]
  %v29 = vld [vmem:[%s5 + $0x30] sm:$0xff]
  %v30 = vld [vmem:[%s5 + $0x38] sm:$0xff]
  %v31 = vld [vmem:[%s5 + $0x40] sm:$0xff]
  %v32 = vld [vmem:[%s5 + $0x48] sm:$0xff]
  %v33 = vld [vmem:[%s5 + $0x50] sm:$0xff]
  %v34 = vld [vmem:[%s5 + $0x58] sm:$0xff]
  %v35 = vld [vmem:[%s5 + $0x60] sm:$0xff]
  %v36 = vld [vmem:[%s5 + $0x68] sm:$0xff]
  %v37 = vld [vmem:[%s5 + $0x70] sm:$0xff]
  %v38 = vld [vmem:[%s5 + $0x78] sm:$0xff]
  %v39 = vld [vmem:[%s1] sm:$0xff]
  %v40 = vld [vmem:[%s1 + $0x8] sm:$0xff]
  %v41 = vld [vmem:[%s1 + $0x10] sm:$0xff]
  %v42 = vld [vmem:[%s1 + $0x18] sm:$0xff]
  %v43 = vld [vmem:[%s1 + $0x20] sm:$0xff]
  %v44 = vld [vmem:[%s1 + $0x28] sm:$0xff]
  %v45 = vld [vmem:[%s1 + $0x30] sm:$0xff]
  %v46 = vld [vmem:[%s1 + $0x38] sm:$0xff]
  %v47 = vld [vmem:[%s1 + $0x40] sm:$0xff]
  %v48 = vld [vmem:[%s1 + $0x48] sm:$0xff]
  %v49 = vld [vmem:[%s1 + $0x50] sm:$0xff]
  %v50 = vld [vmem:[%s1 + $0x58] sm:$0xff]
  %v51 = vld [vmem:[%s1 + $0x60] sm:$0xff]
  %v52 = vld [vmem:[%s1 + $0x68] sm:$0xff]
  %v53 = vld [vmem:[%s1 + $0x70] sm:$0xff]
  %v54 = vld [vmem:[%s1 + $0x78] sm:$0xff]
  %v55 = vld [vmem:[%s0] sm:$0xff]
  %v56 = vld [vmem:[%s0 + $0x8] sm:$0xf]
  %58 = vset.pattern.permute.xlu0 1
  %59 = vperm.xlu0 %58, %v23
  %v60 = vpop.permute.xlu0 %59
  %63 = vset.pattern.permute.xlu0 1
  %64 = vperm.xlu0 %63, %v24
  %v65 = vpop.permute.xlu0 %64
  %68 = vset.pattern.permute.xlu0 1
  %69 = vperm.xlu0 %68, %v25
  %v70 = vpop.permute.xlu0 %69
  %73 = vset.pattern.permute.xlu0 1
  %74 = vperm.xlu0 %73, %v26
  %v75 = vpop.permute.xlu0 %74
  %78 = vset.pattern.permute.xlu0 1
  %79 = vperm.xlu0 %78, %v27
  %v80 = vpop.permute.xlu0 %79
  %83 = vset.pattern.permute.xlu0 1
  %84 = vperm.xlu0 %83, %v28
  %v85 = vpop.permute.xlu0 %84
  %88 = vset.pattern.permute.xlu0 1
  %89 = vperm.xlu0 %88, %v29
  %v90 = vpop.permute.xlu0 %89
  %93 = vset.pattern.permute.xlu0 1
  %94 = vperm.xlu0 %93, %v30
  %v95 = vpop.permute.xlu0 %94
  %98 = vset.pattern.permute.xlu0 1
  %99 = vperm.xlu0 %98, %v31
  %v100 = vpop.permute.xlu0 %99
  %103 = vset.pattern.permute.xlu0 1
  %104 = vperm.xlu0 %103, %v32
  %v105 = vpop.permute.xlu0 %104
  %108 = vset.pattern.permute.xlu0 1
  %109 = vperm.xlu0 %108, %v33
  %v110 = vpop.permute.xlu0 %109
  %113 = vset.pattern.permute.xlu0 1
  %114 = vperm.xlu0 %113, %v34
  %v115 = vpop.permute.xlu0 %114
  %118 = vset.pattern.permute.xlu0 1
  %119 = vperm.xlu0 %118, %v35
  %v120 = vpop.permute.xlu0 %119
  %123 = vset.pattern.permute.xlu0 1
  %124 = vperm.xlu0 %123, %v36
  %v125 = vpop.permute.xlu0 %124
  %128 = vset.pattern.permute.xlu0 1
  %129 = vperm.xlu0 %128, %v37
  %v130 = vpop.permute.xlu0 %129
  %133 = vset.pattern.permute.xlu0 1
  %134 = vperm.xlu0 %133, %v38
  %v135 = vpop.permute.xlu0 %134
  %vm137 = vcmask 97280
  %v139 = vsel %vm137, %v39, 0
  %v142 = vsel %vm137, %v40, 0
  %v145 = vsel %vm137, %v41, 0
  %v148 = vsel %vm137, %v42, 0
  %v151 = vsel %vm137, %v43, 0
  %v154 = vsel %vm137, %v44, 0
  %v157 = vsel %vm137, %v45, 0
  %v160 = vsel %vm137, %v46, 0
  %v163 = vsel %vm137, %v47, 0
  %v166 = vsel %vm137, %v48, 0
  %v169 = vsel %vm137, %v49, 0
  %v172 = vsel %vm137, %v50, 0
  %v175 = vsel %vm137, %v51, 0
  %v178 = vsel %vm137, %v52, 0
  %v181 = vsel %vm137, %v53, 0
  %v184 = vsel %vm137, %v54, 0
  %vm186 = vcmask 1043456
  %v188 = vsel %vm186, %v56, 0
  %190 = vmatprep.subr.mxu0 0.0
  %191 = vmatpush1.msra.mxu0 0.0
  %192 = vmatprep.subr.mxu0 0.0
  %193 = vmatpush1.msra.mxu0 0.0
  %194 = vmatprep.subr.mxu0 0.0
  %195 = vmatpush1.msra.mxu0 0.0
  %196 = vmatprep.subr.mxu0 0.0
  %197 = vmatpush1.msra.mxu0 0.0
  %198 = vmatprep.subr.mxu0 0.0
  %199 = vmatpush1.msra.mxu0 0.0
  %200 = vmatprep.subr.mxu0 0.0
  %201 = vmatpush1.msra.mxu0 0.0
  %202 = vmatprep.subr.mxu0 0.0
  %203 = vmatpush1.msra.mxu0 0.0
  %204 = vmatprep.subr.mxu0 0.0
  %205 = vmatpush1.msra.mxu0 0.0
  %206 = vmatprep.subr.mxu0 0.0
  %207 = vmatpush1.msra.mxu0 0.0
  %208 = vmatprep.subr.mxu0 0.0
  %209 = vmatpush1.msra.mxu0 0.0
  %210 = vmatprep.subr.mxu0 0.0
  %211 = vmatpush1.msra.mxu0 0.0
  %212 = vmatprep.subr.mxu0 0.0
  %213 = vmatpush1.msra.mxu0 0.0
  %214 = vmatprep.subr.mxu0 0.0
  %215 = vmatpush1.msra.mxu0 0.0
  %216 = vmatprep.subr.mxu0 0.0
  %217 = vmatpush1.msra.mxu0 0.0
  %218 = vmatprep.subr.mxu0 0.0
  %219 = vmatpush1.msra.mxu0 %v188
  %220 = vmatprep.subr.mxu0 0.0
  %221 = vmatpush1.msra.mxu0 %v55
  %222 = vmatprep.subr.mxu0 0.0
  %223 = vmatpush2.msra.mxu0 0.0
  %224 = vmatprep.subr.mxu0 0.0
  %225 = vmatpush2.msra.mxu0 0.0
  %226 = vmatprep.subr.mxu0 0.0
  %227 = vmatpush2.msra.mxu0 0.0
  %228 = vmatprep.subr.mxu0 0.0
  %229 = vmatpush2.msra.mxu0 0.0
  %230 = vmatprep.subr.mxu0 0.0
  %231 = vmatpush2.msra.mxu0 0.0
  %232 = vmatprep.subr.mxu0 0.0
  %233 = vmatpush2.msra.mxu0 0.0
  %234 = vmatprep.subr.mxu0 0.0
  %235 = vmatpush2.msra.mxu0 0.0
  %236 = vmatprep.subr.mxu0 0.0
  %237 = vmatpush2.msra.mxu0 0.0
  %238 = vmatprep.subr.mxu0 0.0
  %239 = vmatpush2.msra.mxu0 0.0
  %240 = vmatprep.subr.mxu0 0.0
  %241 = vmatpush2.msra.mxu0 0.0
  %242 = vmatprep.subr.mxu0 0.0
  %243 = vmatpush2.msra.mxu0 0.0
  %244 = vmatprep.subr.mxu0 0.0
  %245 = vmatpush2.msra.mxu0 0.0
  %246 = vmatprep.subr.mxu0 0.0
  %247 = vmatpush2.msra.mxu0 0.0
  %248 = vmatprep.subr.mxu0 0.0
  %249 = vmatpush2.msra.mxu0 0.0
  %250 = vmatprep.subr.mxu0 0.0
  %251 = vmatpush2.msra.mxu0 0.0
  %252 = vmatprep.subr.mxu0 0.0
  %253 = vmatpush2.msra.mxu0 0.0
  %254 = vmatprep.mubr.f32.mxu0 0.0
  %255 = vmatmul.mubr.f32.gmra.mxu0 %v139
  %v256 = vpop.f32.mrf.mxu0
  %v257 = vadd.f32 %v60, %v256
  %v258 = vpop.f32.mrf.mxu0
  %259 = vmatprep.mubr.f32.mxu0 0.0
  %260 = vmatmul.mubr.f32.gmra.mxu0 %v142
  %v261 = vpop.f32.mrf.mxu0
  %v262 = vadd.f32 %v65, %v261
  %v263 = vpop.f32.mrf.mxu0
  %264 = vmatprep.mubr.f32.mxu0 0.0
  %265 = vmatmul.mubr.f32.gmra.mxu0 %v145
  %v266 = vpop.f32.mrf.mxu0
  %v267 = vadd.f32 %v70, %v266
  %v268 = vpop.f32.mrf.mxu0
  %269 = vmatprep.mubr.f32.mxu0 0.0
  %270 = vmatmul.mubr.f32.gmra.mxu0 %v148
  %v271 = vpop.f32.mrf.mxu0
  %v272 = vadd.f32 %v75, %v271
  %v273 = vpop.f32.mrf.mxu0
  %274 = vmatprep.mubr.f32.mxu0 0.0
  %275 = vmatmul.mubr.f32.gmra.mxu0 %v151
  %v276 = vpop.f32.mrf.mxu0
  %v277 = vadd.f32 %v80, %v276
  %v278 = vpop.f32.mrf.mxu0
  %279 = vmatprep.mubr.f32.mxu0 0.0
  %280 = vmatmul.mubr.f32.gmra.mxu0 %v154
  %v281 = vpop.f32.mrf.mxu0
  %v282 = vadd.f32 %v85, %v281
  %v283 = vpop.f32.mrf.mxu0
  %284 = vmatprep.mubr.f32.mxu0 0.0
  %285 = vmatmul.mubr.f32.gmra.mxu0 %v157
  %v286 = vpop.f32.mrf.mxu0
  %v287 = vadd.f32 %v90, %v286
  %v288 = vpop.f32.mrf.mxu0
  %289 = vmatprep.mubr.f32.mxu0 0.0
  %290 = vmatmul.mubr.f32.gmra.mxu0 %v160
  %v291 = vpop.f32.mrf.mxu0
  %v292 = vadd.f32 %v95, %v291
  %v293 = vpop.f32.mrf.mxu0
  %294 = vmatprep.mubr.f32.mxu0 0.0
  %295 = vmatmul.mubr.f32.gmra.mxu0 %v163
  %v296 = vpop.f32.mrf.mxu0
  %v297 = vadd.f32 %v100, %v296
  %v298 = vpop.f32.mrf.mxu0
  %299 = vmatprep.mubr.f32.mxu0 0.0
  %300 = vmatmul.mubr.f32.gmra.mxu0 %v166
  %v301 = vpop.f32.mrf.mxu0
  %v302 = vadd.f32 %v105, %v301
  %v303 = vpop.f32.mrf.mxu0
  %304 = vmatprep.mubr.f32.mxu0 0.0
  %305 = vmatmul.mubr.f32.gmra.mxu0 %v169
  %v306 = vpop.f32.mrf.mxu0
  %v307 = vadd.f32 %v110, %v306
  %v308 = vpop.f32.mrf.mxu0
  %309 = vmatprep.mubr.f32.mxu0 0.0
  %310 = vmatmul.mubr.f32.gmra.mxu0 %v172
  %v311 = vpop.f32.mrf.mxu0
  %v312 = vadd.f32 %v115, %v311
  %v313 = vpop.f32.mrf.mxu0
  %314 = vmatprep.mubr.f32.mxu0 0.0
  %315 = vmatmul.mubr.f32.gmra.mxu0 %v175
  %v316 = vpop.f32.mrf.mxu0
  %v317 = vadd.f32 %v120, %v316
  %v318 = vpop.f32.mrf.mxu0
  %319 = vmatprep.mubr.f32.mxu0 0.0
  %320 = vmatmul.mubr.f32.gmra.mxu0 %v178
  %v321 = vpop.f32.mrf.mxu0
  %v322 = vadd.f32 %v125, %v321
  %v323 = vpop.f32.mrf.mxu0
  %324 = vmatprep.mubr.f32.mxu0 0.0
  %325 = vmatmul.mubr.f32.gmra.mxu0 %v181
  %v326 = vpop.f32.mrf.mxu0
  %v327 = vadd.f32 %v130, %v326
  %v328 = vpop.f32.mrf.mxu0
  %329 = vmatprep.mubr.f32.mxu0 0.0
  %330 = vmatmul.mubr.f32.gmra.mxu0 %v184
  %v331 = vpop.f32.mrf.mxu0
  %v332 = vadd.f32 %v135, %v331
  %v333 = vpop.f32.mrf.mxu0
  %334 = vdwg.mxu0
  %vm335 = vcmp.gt.f32.partialorder %v257, 0.0
  %vm336 = vcmp.gt.f32.partialorder %v262, 0.0
  %vm337 = vcmp.gt.f32.partialorder %v267, 0.0
  %vm338 = vcmp.gt.f32.partialorder %v272, 0.0
  %vm339 = vcmp.gt.f32.partialorder %v277, 0.0
  %vm340 = vcmp.gt.f32.partialorder %v282, 0.0
  %vm341 = vcmp.gt.f32.partialorder %v287, 0.0
  %vm342 = vcmp.gt.f32.partialorder %v292, 0.0
  %vm343 = vcmp.gt.f32.partialorder %v297, 0.0
  %vm344 = vcmp.gt.f32.partialorder %v302, 0.0
  %vm345 = vcmp.gt.f32.partialorder %v307, 0.0
  %vm346 = vcmp.gt.f32.partialorder %v312, 0.0
  %vm347 = vcmp.gt.f32.partialorder %v317, 0.0
  %vm348 = vcmp.gt.f32.partialorder %v322, 0.0
  %vm349 = vcmp.gt.f32.partialorder %v327, 0.0
  %vm350 = vcmp.gt.f32.partialorder %v332, 0.0
  %v351 = vsel %vm335, 1.0, 0.2
  %v352 = vsel %vm336, 1.0, 0.2
  %v353 = vsel %vm337, 1.0, 0.2
  %v354 = vsel %vm338, 1.0, 0.2
  %v355 = vsel %vm339, 1.0, 0.2
  %v356 = vsel %vm340, 1.0, 0.2
  %v357 = vsel %vm341, 1.0, 0.2
  %v358 = vsel %vm342, 1.0, 0.2
  %v359 = vsel %vm343, 1.0, 0.2
  %v360 = vsel %vm344, 1.0, 0.2
  %v361 = vsel %vm345, 1.0, 0.2
  %v362 = vsel %vm346, 1.0, 0.2
  %v363 = vsel %vm347, 1.0, 0.2
  %v364 = vsel %vm348, 1.0, 0.2
  %v365 = vsel %vm349, 1.0, 0.2
  %v366 = vsel %vm350, 1.0, 0.2
  %v367 = vmul.f32 %v257, %v351
  %v368 = vmul.f32 %v262, %v352
  %v369 = vmul.f32 %v267, %v353
  %v370 = vmul.f32 %v272, %v354
  %v371 = vmul.f32 %v277, %v355
  %v372 = vmul.f32 %v282, %v356
  %v373 = vmul.f32 %v287, %v357
  %v374 = vmul.f32 %v292, %v358
  %v375 = vmul.f32 %v297, %v359
  %v376 = vmul.f32 %v302, %v360
  %v377 = vmul.f32 %v307, %v361
  %v378 = vmul.f32 %v312, %v362
  %v379 = vmul.f32 %v317, %v363
  %v380 = vmul.f32 %v322, %v364
  %v381 = vmul.f32 %v327, %v365
  %v382 = vmul.f32 %v332, %v366
  %383 = vst [vmem:[#allocation2] sm:$0xff] %v367
  %384 = vst [vmem:[#allocation2 + $0x10] sm:$0xff] %v368
  %385 = vst [vmem:[#allocation2 + $0x20] sm:$0xff] %v369
  %386 = vst [vmem:[#allocation2 + $0x30] sm:$0xff] %v370
  %387 = vst [vmem:[#allocation2 + $0x40] sm:$0xff] %v371
  %388 = vst [vmem:[#allocation2 + $0x50] sm:$0xff] %v372
  %389 = vst [vmem:[#allocation2 + $0x60] sm:$0xff] %v373
  %390 = vst [vmem:[#allocation2 + $0x70] sm:$0xff] %v374
  %391 = vst [vmem:[#allocation2 + $0x80] sm:$0xff] %v375
  %392 = vst [vmem:[#allocation2 + $0x90] sm:$0xff] %v376
  %393 = vst [vmem:[#allocation2 + $0xa0] sm:$0xff] %v377
  %394 = vst [vmem:[#allocation2 + $0xb0] sm:$0xff] %v378
  %395 = vst [vmem:[#allocation2 + $0xc0] sm:$0xff] %v379
  %396 = vst [vmem:[#allocation2 + $0xd0] sm:$0xff] %v380
  %397 = vst [vmem:[#allocation2 + $0xe0] sm:$0xff] %v381
  %398 = vst [vmem:[#allocation2 + $0xf0] sm:$0xff] %v382
  %399 = vset.pattern.permute.xlu0 0
  %400 = vperm.xlu0 %399, %v23
  %v401 = vpop.permute.xlu0 %400
  %403 = vset.pattern.permute.xlu0 0
  %404 = vperm.xlu0 %403, %v24
  %v405 = vpop.permute.xlu0 %404
  %407 = vset.pattern.permute.xlu0 0
  %408 = vperm.xlu0 %407, %v25
  %v409 = vpop.permute.xlu0 %408
  %411 = vset.pattern.permute.xlu0 0
  %412 = vperm.xlu0 %411, %v26
  %v413 = vpop.permute.xlu0 %412
  %415 = vset.pattern.permute.xlu0 0
  %416 = vperm.xlu0 %415, %v27
  %v417 = vpop.permute.xlu0 %416
  %419 = vset.pattern.permute.xlu0 0
  %420 = vperm.xlu0 %419, %v28
  %v421 = vpop.permute.xlu0 %420
  %423 = vset.pattern.permute.xlu0 0
  %424 = vperm.xlu0 %423, %v29
  %v425 = vpop.permute.xlu0 %424
  %427 = vset.pattern.permute.xlu0 0
  %428 = vperm.xlu0 %427, %v30
  %v429 = vpop.permute.xlu0 %428
  %431 = vset.pattern.permute.xlu0 0
  %432 = vperm.xlu0 %431, %v31
  %v433 = vpop.permute.xlu0 %432
  %435 = vset.pattern.permute.xlu0 0
  %436 = vperm.xlu0 %435, %v32
  %v437 = vpop.permute.xlu0 %436
  %439 = vset.pattern.permute.xlu0 0
  %440 = vperm.xlu0 %439, %v33
  %v441 = vpop.permute.xlu0 %440
  %443 = vset.pattern.permute.xlu0 0
  %444 = vperm.xlu0 %443, %v34
  %v445 = vpop.permute.xlu0 %444
  %447 = vset.pattern.permute.xlu0 0
  %448 = vperm.xlu0 %447, %v35
  %v449 = vpop.permute.xlu0 %448
  %451 = vset.pattern.permute.xlu0 0
  %452 = vperm.xlu0 %451, %v36
  %v453 = vpop.permute.xlu0 %452
  %455 = vset.pattern.permute.xlu0 0
  %456 = vperm.xlu0 %455, %v37
  %v457 = vpop.permute.xlu0 %456
  %459 = vset.pattern.permute.xlu0 0
  %460 = vperm.xlu0 %459, %v38
  %v461 = vpop.permute.xlu0 %460
  %v463 = vmul.f32 %v351, %v401
  %v464 = vmul.f32 %v352, %v405
  %v465 = vmul.f32 %v353, %v409
  %v466 = vmul.f32 %v354, %v413
  %v467 = vmul.f32 %v355, %v417
  %v468 = vmul.f32 %v356, %v421
  %v469 = vmul.f32 %v357, %v425
  %v470 = vmul.f32 %v358, %v429
  %v471 = vmul.f32 %v359, %v433
  %v472 = vmul.f32 %v360, %v437
  %v473 = vmul.f32 %v361, %v441
  %v474 = vmul.f32 %v362, %v445
  %v475 = vmul.f32 %v363, %v449
  %v476 = vmul.f32 %v364, %v453
  %v477 = vmul.f32 %v365, %v457
  %v478 = vmul.f32 %v366, %v461
  %479 = vst [vmem:[#allocation2 + $0x8] sm:$0xff] %v463
  %480 = vst [vmem:[#allocation2 + $0x18] sm:$0xff] %v464
  %481 = vst [vmem:[#allocation2 + $0x28] sm:$0xff] %v465
  %482 = vst [vmem:[#allocation2 + $0x38] sm:$0xff] %v466
  %483 = vst [vmem:[#allocation2 + $0x48] sm:$0xff] %v467
  %484 = vst [vmem:[#allocation2 + $0x58] sm:$0xff] %v468
  %485 = vst [vmem:[#allocation2 + $0x68] sm:$0xff] %v469
  %486 = vst [vmem:[#allocation2 + $0x78] sm:$0xff] %v470
  %487 = vst [vmem:[#allocation2 + $0x88] sm:$0xff] %v471
  %488 = vst [vmem:[#allocation2 + $0x98] sm:$0xff] %v472
  %489 = vst [vmem:[#allocation2 + $0xa8] sm:$0xff] %v473
  %490 = vst [vmem:[#allocation2 + $0xb8] sm:$0xff] %v474
  %491 = vst [vmem:[#allocation2 + $0xc8] sm:$0xff] %v475
  %492 = vst [vmem:[#allocation2 + $0xd8] sm:$0xff] %v476
  %493 = vst [vmem:[#allocation2 + $0xe8] sm:$0xff] %v477
  %494 = vst [vmem:[#allocation2 + $0xf8] sm:$0xff] %v478
  %v495 = vld [vmem:[%s2] sm:$0xff]
  %v496 = vld [vmem:[%s2 + $0x8] sm:$0xff]
  %v497 = vld [vmem:[%s2 + $0x10] sm:$0xff]
  %v498 = vld [vmem:[%s2 + $0x18] sm:$0xff]
  %v499 = vld [vmem:[%s2 + $0x20] sm:$0xff]
  %v500 = vld [vmem:[%s2 + $0x28] sm:$0xff]
  %v501 = vld [vmem:[%s2 + $0x30] sm:$0xff]
  %v502 = vld [vmem:[%s2 + $0x38] sm:$0xff]
  %v503 = vld [vmem:[%s2 + $0x40] sm:$0xff]
  %v504 = vld [vmem:[%s2 + $0x48] sm:$0xff]
  %v505 = vld [vmem:[%s2 + $0x50] sm:$0xff]
  %v506 = vld [vmem:[%s2 + $0x58] sm:$0xff]
  %v507 = vld [vmem:[%s2 + $0x60] sm:$0xff]
  %v508 = vld [vmem:[%s2 + $0x68] sm:$0xff]
  %v509 = vld [vmem:[%s2 + $0x70] sm:$0xff]
  %v510 = vld [vmem:[%s2 + $0x78] sm:$0xff]
  %v511 = vld [vmem:[#allocation2] sm:$0xff]
  %v512 = vld [vmem:[#allocation2 + $0x8] sm:$0xff]
  %v513 = vld [vmem:[#allocation2 + $0x10] sm:$0xff]
  %v514 = vld [vmem:[#allocation2 + $0x18] sm:$0xff]
  %v515 = vld [vmem:[#allocation2 + $0x20] sm:$0xff]
  %v516 = vld [vmem:[#allocation2 + $0x28] sm:$0xff]
  %v517 = vld [vmem:[#allocation2 + $0x30] sm:$0xff]
  %v518 = vld [vmem:[#allocation2 + $0x38] sm:$0xff]
  %v519 = vld [vmem:[#allocation2 + $0x40] sm:$0xff]
  %v520 = vld [vmem:[#allocation2 + $0x48] sm:$0xff]
  %v521 = vld [vmem:[#allocation2 + $0x50] sm:$0xff]
  %v522 = vld [vmem:[#allocation2 + $0x58] sm:$0xff]
  %v523 = vld [vmem:[#allocation2 + $0x60] sm:$0xff]
  %v524 = vld [vmem:[#allocation2 + $0x68] sm:$0xff]
  %v525 = vld [vmem:[#allocation2 + $0x70] sm:$0xff]
  %v526 = vld [vmem:[#allocation2 + $0x78] sm:$0xff]
  %v527 = vld [vmem:[#allocation2 + $0x80] sm:$0xff]
  %v528 = vld [vmem:[#allocation2 + $0x88] sm:$0xff]
  %v529 = vld [vmem:[#allocation2 + $0x90] sm:$0xff]
  %v530 = vld [vmem:[#allocation2 + $0x98] sm:$0xff]
  %v531 = vld [vmem:[#allocation2 + $0xa0] sm:$0xff]
  %v532 = vld [vmem:[#allocation2 + $0xa8] sm:$0xff]
  %v533 = vld [vmem:[#allocation2 + $0xb0] sm:$0xff]
  %v534 = vld [vmem:[#allocation2 + $0xb8] sm:$0xff]
  %v535 = vld [vmem:[#allocation2 + $0xc0] sm:$0xff]
  %v536 = vld [vmem:[#allocation2 + $0xc8] sm:$0xff]
  %v537 = vld [vmem:[#allocation2 + $0xd0] sm:$0xff]
  %v538 = vld [vmem:[#allocation2 + $0xd8] sm:$0xff]
  %v539 = vld [vmem:[#allocation2 + $0xe0] sm:$0xff]
  %v540 = vld [vmem:[#allocation2 + $0xe8] sm:$0xff]
  %v541 = vld [vmem:[#allocation2 + $0xf0] sm:$0xff]
  %v542 = vld [vmem:[#allocation2 + $0xf8] sm:$0xff]
  %543 = vmatprep.subr.mxu0 %v542
  %544 = vmatpush1.msra.mxu0 %v541
  %545 = vmatprep.subr.mxu0 %v540
  %546 = vmatpush1.msra.mxu0 %v539
  %547 = vmatprep.subr.mxu0 %v538
  %548 = vmatpush1.msra.mxu0 %v537
  %549 = vmatprep.subr.mxu0 %v536
  %550 = vmatpush1.msra.mxu0 %v535
  %551 = vmatprep.subr.mxu0 %v534
  %552 = vmatpush1.msra.mxu0 %v533
  %553 = vmatprep.subr.mxu0 %v532
  %554 = vmatpush1.msra.mxu0 %v531
  %555 = vmatprep.subr.mxu0 %v530
  %556 = vmatpush1.msra.mxu0 %v529
  %557 = vmatprep.subr.mxu0 %v528
  %558 = vmatpush1.msra.mxu0 %v527
  %559 = vmatprep.subr.mxu0 %v526
  %560 = vmatpush1.msra.mxu0 %v525
  %561 = vmatprep.subr.mxu0 %v524
  %562 = vmatpush1.msra.mxu0 %v523
  %563 = vmatprep.subr.mxu0 %v522
  %564 = vmatpush1.msra.mxu0 %v521
  %565 = vmatprep.subr.mxu0 %v520
  %566 = vmatpush1.msra.mxu0 %v519
  %567 = vmatprep.subr.mxu0 %v518
  %568 = vmatpush1.msra.mxu0 %v517
  %569 = vmatprep.subr.mxu0 %v516
  %570 = vmatpush1.msra.mxu0 %v515
  %571 = vmatprep.subr.mxu0 %v514
  %572 = vmatpush1.msra.mxu0 %v513
  %573 = vmatprep.subr.mxu0 %v512
  %574 = vmatpush1.msra.mxu0 %v511
  %575 = vmatprep.subr.mxu0 0.0
  %576 = vmatpush2.msra.mxu0 0.0
  %577 = vmatprep.subr.mxu0 0.0
  %578 = vmatpush2.msra.mxu0 0.0
  %579 = vmatprep.subr.mxu0 0.0
  %580 = vmatpush2.msra.mxu0 0.0
  %581 = vmatprep.subr.mxu0 0.0
  %582 = vmatpush2.msra.mxu0 0.0
  %583 = vmatprep.subr.mxu0 0.0
  %584 = vmatpush2.msra.mxu0 0.0
  %585 = vmatprep.subr.mxu0 0.0
  %586 = vmatpush2.msra.mxu0 0.0
  %587 = vmatprep.subr.mxu0 0.0
  %588 = vmatpush2.msra.mxu0 0.0
  %589 = vmatprep.subr.mxu0 0.0
  %590 = vmatpush2.msra.mxu0 0.0
  %591 = vmatprep.subr.mxu0 0.0
  %592 = vmatpush2.msra.mxu0 0.0
  %593 = vmatprep.subr.mxu0 0.0
  %594 = vmatpush2.msra.mxu0 0.0
  %595 = vmatprep.subr.mxu0 0.0
  %596 = vmatpush2.msra.mxu0 0.0
  %597 = vmatprep.subr.mxu0 0.0
  %598 = vmatpush2.msra.mxu0 0.0
  %599 = vmatprep.subr.mxu0 0.0
  %600 = vmatpush2.msra.mxu0 0.0
  %601 = vmatprep.subr.mxu0 0.0
  %602 = vmatpush2.msra.mxu0 0.0
  %603 = vmatprep.subr.mxu0 0.0
  %604 = vmatpush2.msra.mxu0 0.0
  %605 = vmatprep.subr.mxu0 0.0
  %606 = vmatpush2.msra.mxu0 0.0
  %607 = vmatprep.mubr.f32.mxu0 0.0
  %608 = vmatmul.mubr.f32.gmra.mxu0 %v495
  %v609 = vpop.f32.mrf.mxu0
  %v610 = vadd.f32 0.0, %v609
  %v611 = vpop.f32.mrf.mxu0
  %v612 = vadd.f32 0.0, %v611
  %613 = vmatprep.mubr.f32.mxu0 0.0
  %614 = vmatmul.mubr.f32.gmra.mxu0 %v496
  %v615 = vpop.f32.mrf.mxu0
  %v616 = vadd.f32 0.0, %v615
  %v617 = vpop.f32.mrf.mxu0
  %v618 = vadd.f32 0.0, %v617
  %619 = vmatprep.mubr.f32.mxu0 0.0
  %620 = vmatmul.mubr.f32.gmra.mxu0 %v497
  %v621 = vpop.f32.mrf.mxu0
  %v622 = vadd.f32 0.0, %v621
  %v623 = vpop.f32.mrf.mxu0
  %v624 = vadd.f32 0.0, %v623
  %625 = vmatprep.mubr.f32.mxu0 0.0
  %626 = vmatmul.mubr.f32.gmra.mxu0 %v498
  %v627 = vpop.f32.mrf.mxu0
  %v628 = vadd.f32 0.0, %v627
  %v629 = vpop.f32.mrf.mxu0
  %v630 = vadd.f32 0.0, %v629
  %631 = vmatprep.mubr.f32.mxu0 0.0
  %632 = vmatmul.mubr.f32.gmra.mxu0 %v499
  %v633 = vpop.f32.mrf.mxu0
  %v634 = vadd.f32 0.0, %v633
  %v635 = vpop.f32.mrf.mxu0
  %v636 = vadd.f32 0.0, %v635
  %637 = vmatprep.mubr.f32.mxu0 0.0
  %638 = vmatmul.mubr.f32.gmra.mxu0 %v500
  %v639 = vpop.f32.mrf.mxu0
  %v640 = vadd.f32 0.0, %v639
  %v641 = vpop.f32.mrf.mxu0
  %v642 = vadd.f32 0.0, %v641
  %643 = vmatprep.mubr.f32.mxu0 0.0
  %644 = vmatmul.mubr.f32.gmra.mxu0 %v501
  %v645 = vpop.f32.mrf.mxu0
  %v646 = vadd.f32 0.0, %v645
  %v647 = vpop.f32.mrf.mxu0
  %v648 = vadd.f32 0.0, %v647
  %649 = vmatprep.mubr.f32.mxu0 0.0
  %650 = vmatmul.mubr.f32.gmra.mxu0 %v502
  %v651 = vpop.f32.mrf.mxu0
  %v652 = vadd.f32 0.0, %v651
  %v653 = vpop.f32.mrf.mxu0
  %v654 = vadd.f32 0.0, %v653
  %655 = vmatprep.mubr.f32.mxu0 0.0
  %656 = vmatmul.mubr.f32.gmra.mxu0 %v503
  %v657 = vpop.f32.mrf.mxu0
  %v658 = vadd.f32 0.0, %v657
  %v659 = vpop.f32.mrf.mxu0
  %v660 = vadd.f32 0.0, %v659
  %661 = vmatprep.mubr.f32.mxu0 0.0
  %662 = vmatmul.mubr.f32.gmra.mxu0 %v504
  %v663 = vpop.f32.mrf.mxu0
  %v664 = vadd.f32 0.0, %v663
  %v665 = vpop.f32.mrf.mxu0
  %v666 = vadd.f32 0.0, %v665
  %667 = vmatprep.mubr.f32.mxu0 0.0
  %668 = vmatmul.mubr.f32.gmra.mxu0 %v505
  %v669 = vpop.f32.mrf.mxu0
  %v670 = vadd.f32 0.0, %v669
  %v671 = vpop.f32.mrf.mxu0
  %v672 = vadd.f32 0.0, %v671
  %673 = vmatprep.mubr.f32.mxu0 0.0
  %674 = vmatmul.mubr.f32.gmra.mxu0 %v506
  %v675 = vpop.f32.mrf.mxu0
  %v676 = vadd.f32 0.0, %v675
  %v677 = vpop.f32.mrf.mxu0
  %v678 = vadd.f32 0.0, %v677
  %679 = vmatprep.mubr.f32.mxu0 0.0
  %680 = vmatmul.mubr.f32.gmra.mxu0 %v507
  %v681 = vpop.f32.mrf.mxu0
  %v682 = vadd.f32 0.0, %v681
  %v683 = vpop.f32.mrf.mxu0
  %v684 = vadd.f32 0.0, %v683
  %685 = vmatprep.mubr.f32.mxu0 0.0
  %686 = vmatmul.mubr.f32.gmra.mxu0 %v508
  %v687 = vpop.f32.mrf.mxu0
  %v688 = vadd.f32 0.0, %v687
  %v689 = vpop.f32.mrf.mxu0
  %v690 = vadd.f32 0.0, %v689
  %691 = vmatprep.mubr.f32.mxu0 0.0
  %692 = vmatmul.mubr.f32.gmra.mxu0 %v509
  %v693 = vpop.f32.mrf.mxu0
  %v694 = vadd.f32 0.0, %v693
  %v695 = vpop.f32.mrf.mxu0
  %v696 = vadd.f32 0.0, %v695
  %697 = vmatprep.mubr.f32.mxu0 0.0
  %698 = vmatmul.mubr.f32.gmra.mxu0 %v510
  %v699 = vpop.f32.mrf.mxu0
  %v700 = vadd.f32 0.0, %v699
  %v701 = vpop.f32.mrf.mxu0
  %v702 = vadd.f32 0.0, %v701
  %703 = vdwg.mxu0
  %704 = vset.pattern.permute.xlu0 2
  %705 = vperm.xlu0 %704, %v23
  %v706 = vpop.permute.xlu0 %705
  %708 = vset.pattern.permute.xlu0 2
  %709 = vperm.xlu0 %708, %v24
  %v710 = vpop.permute.xlu0 %709
  %712 = vset.pattern.permute.xlu0 2
  %713 = vperm.xlu0 %712, %v25
  %v714 = vpop.permute.xlu0 %713
  %716 = vset.pattern.permute.xlu0 2
  %717 = vperm.xlu0 %716, %v26
  %v718 = vpop.permute.xlu0 %717
  %720 = vset.pattern.permute.xlu0 2
  %721 = vperm.xlu0 %720, %v27
  %v722 = vpop.permute.xlu0 %721
  %724 = vset.pattern.permute.xlu0 2
  %725 = vperm.xlu0 %724, %v28
  %v726 = vpop.permute.xlu0 %725
  %728 = vset.pattern.permute.xlu0 2
  %729 = vperm.xlu0 %728, %v29
  %v730 = vpop.permute.xlu0 %729
  %732 = vset.pattern.permute.xlu0 2
  %733 = vperm.xlu0 %732, %v30
  %v734 = vpop.permute.xlu0 %733
  %736 = vset.pattern.permute.xlu0 2
  %737 = vperm.xlu0 %736, %v31
  %v738 = vpop.permute.xlu0 %737
  %740 = vset.pattern.permute.xlu0 2
  %741 = vperm.xlu0 %740, %v32
  %v742 = vpop.permute.xlu0 %741
  %744 = vset.pattern.permute.xlu0 2
  %745 = vperm.xlu0 %744, %v33
  %v746 = vpop.permute.xlu0 %745
  %748 = vset.pattern.permute.xlu0 2
  %749 = vperm.xlu0 %748, %v34
  %v750 = vpop.permute.xlu0 %749
  %752 = vset.pattern.permute.xlu0 2
  %753 = vperm.xlu0 %752, %v35
  %v754 = vpop.permute.xlu0 %753
  %756 = vset.pattern.permute.xlu0 2
  %757 = vperm.xlu0 %756, %v36
  %v758 = vpop.permute.xlu0 %757
  %760 = vset.pattern.permute.xlu0 2
  %761 = vperm.xlu0 %760, %v37
  %v762 = vpop.permute.xlu0 %761
  %764 = vset.pattern.permute.xlu0 2
  %765 = vperm.xlu0 %764, %v38
  %v766 = vpop.permute.xlu0 %765
  %v768 = vadd.f32 %v610, %v706
  %v769 = vadd.f32 %v616, %v710
  %v770 = vadd.f32 %v622, %v714
  %v771 = vadd.f32 %v628, %v718
  %v772 = vadd.f32 %v634, %v722
  %v773 = vadd.f32 %v640, %v726
  %v774 = vadd.f32 %v646, %v730
  %v775 = vadd.f32 %v652, %v734
  %v776 = vadd.f32 %v658, %v738
  %v777 = vadd.f32 %v664, %v742
  %v778 = vadd.f32 %v670, %v746
  %v779 = vadd.f32 %v676, %v750
  %v780 = vadd.f32 %v682, %v754
  %v781 = vadd.f32 %v688, %v758
  %v782 = vadd.f32 %v694, %v762
  %v783 = vadd.f32 %v700, %v766
  %vm784 = vcmp.gt.f32.partialorder %v768, 0.0
  %vm785 = vcmp.gt.f32.partialorder %v769, 0.0
  %vm786 = vcmp.gt.f32.partialorder %v770, 0.0
  %vm787 = vcmp.gt.f32.partialorder %v771, 0.0
  %vm788 = vcmp.gt.f32.partialorder %v772, 0.0
  %vm789 = vcmp.gt.f32.partialorder %v773, 0.0
  %vm790 = vcmp.gt.f32.partialorder %v774, 0.0
  %vm791 = vcmp.gt.f32.partialorder %v775, 0.0
  %vm792 = vcmp.gt.f32.partialorder %v776, 0.0
  %vm793 = vcmp.gt.f32.partialorder %v777, 0.0
  %vm794 = vcmp.gt.f32.partialorder %v778, 0.0
  %vm795 = vcmp.gt.f32.partialorder %v779, 0.0
  %vm796 = vcmp.gt.f32.partialorder %v780, 0.0
  %vm797 = vcmp.gt.f32.partialorder %v781, 0.0
  %vm798 = vcmp.gt.f32.partialorder %v782, 0.0
  %vm799 = vcmp.gt.f32.partialorder %v783, 0.0
  %v800 = vsel %vm784, 1.0, 0.2
  %v801 = vsel %vm785, 1.0, 0.2
  %v802 = vsel %vm786, 1.0, 0.2
  %v803 = vsel %vm787, 1.0, 0.2
  %v804 = vsel %vm788, 1.0, 0.2
  %v805 = vsel %vm789, 1.0, 0.2
  %v806 = vsel %vm790, 1.0, 0.2
  %v807 = vsel %vm791, 1.0, 0.2
  %v808 = vsel %vm792, 1.0, 0.2
  %v809 = vsel %vm793, 1.0, 0.2
  %v810 = vsel %vm794, 1.0, 0.2
  %v811 = vsel %vm795, 1.0, 0.2
  %v812 = vsel %vm796, 1.0, 0.2
  %v813 = vsel %vm797, 1.0, 0.2
  %v814 = vsel %vm798, 1.0, 0.2
  %v815 = vsel %vm799, 1.0, 0.2
  %v816 = vmul.f32 %v768, %v800
  %v817 = vmul.f32 %v769, %v801
  %v818 = vmul.f32 %v770, %v802
  %v819 = vmul.f32 %v771, %v803
  %v820 = vmul.f32 %v772, %v804
  %v821 = vmul.f32 %v773, %v805
  %v822 = vmul.f32 %v774, %v806
  %v823 = vmul.f32 %v775, %v807
  %v824 = vmul.f32 %v776, %v808
  %v825 = vmul.f32 %v777, %v809
  %v826 = vmul.f32 %v778, %v810
  %v827 = vmul.f32 %v779, %v811
  %v828 = vmul.f32 %v780, %v812
  %v829 = vmul.f32 %v781, %v813
  %v830 = vmul.f32 %v782, %v814
  %v831 = vmul.f32 %v783, %v815
  %832 = vst [vmem:[#allocation2] sm:$0xff] %v816
  %833 = vst [vmem:[#allocation2 + $0x10] sm:$0xff] %v817
  %834 = vst [vmem:[#allocation2 + $0x20] sm:$0xff] %v818
  %835 = vst [vmem:[#allocation2 + $0x30] sm:$0xff] %v819
  %836 = vst [vmem:[#allocation2 + $0x40] sm:$0xff] %v820
  %837 = vst [vmem:[#allocation2 + $0x50] sm:$0xff] %v821
  %838 = vst [vmem:[#allocation2 + $0x60] sm:$0xff] %v822
  %839 = vst [vmem:[#allocation2 + $0x70] sm:$0xff] %v823
  %840 = vst [vmem:[#allocation2 + $0x80] sm:$0xff] %v824
  %841 = vst [vmem:[#allocation2 + $0x90] sm:$0xff] %v825
  %842 = vst [vmem:[#allocation2 + $0xa0] sm:$0xff] %v826
  %843 = vst [vmem:[#allocation2 + $0xb0] sm:$0xff] %v827
  %844 = vst [vmem:[#allocation2 + $0xc0] sm:$0xff] %v828
  %845 = vst [vmem:[#allocation2 + $0xd0] sm:$0xff] %v829
  %846 = vst [vmem:[#allocation2 + $0xe0] sm:$0xff] %v830
  %847 = vst [vmem:[#allocation2 + $0xf0] sm:$0xff] %v831
  %v848 = vmul.f32 %v612, %v800
  %v849 = vmul.f32 %v618, %v801
  %v850 = vmul.f32 %v624, %v802
  %v851 = vmul.f32 %v630, %v803
  %v852 = vmul.f32 %v636, %v804
  %v853 = vmul.f32 %v642, %v805
  %v854 = vmul.f32 %v648, %v806
  %v855 = vmul.f32 %v654, %v807
  %v856 = vmul.f32 %v660, %v808
  %v857 = vmul.f32 %v666, %v809
  %v858 = vmul.f32 %v672, %v810
  %v859 = vmul.f32 %v678, %v811
  %v860 = vmul.f32 %v684, %v812
  %v861 = vmul.f32 %v690, %v813
  %v862 = vmul.f32 %v696, %v814
  %v863 = vmul.f32 %v702, %v815
  %864 = vst [vmem:[#allocation2 + $0x8] sm:$0xff] %v848
  %865 = vst [vmem:[#allocation2 + $0x18] sm:$0xff] %v849
  %866 = vst [vmem:[#allocation2 + $0x28] sm:$0xff] %v850
  %867 = vst [vmem:[#allocation2 + $0x38] sm:$0xff] %v851
  %868 = vst [vmem:[#allocation2 + $0x48] sm:$0xff] %v852
  %869 = vst [vmem:[#allocation2 + $0x58] sm:$0xff] %v853
  %870 = vst [vmem:[#allocation2 + $0x68] sm:$0xff] %v854
  %871 = vst [vmem:[#allocation2 + $0x78] sm:$0xff] %v855
  %872 = vst [vmem:[#allocation2 + $0x88] sm:$0xff] %v856
  %873 = vst [vmem:[#allocation2 + $0x98] sm:$0xff] %v857
  %874 = vst [vmem:[#allocation2 + $0xa8] sm:$0xff] %v858
  %875 = vst [vmem:[#allocation2 + $0xb8] sm:$0xff] %v859
  %876 = vst [vmem:[#allocation2 + $0xc8] sm:$0xff] %v860
  %877 = vst [vmem:[#allocation2 + $0xd8] sm:$0xff] %v861
  %878 = vst [vmem:[#allocation2 + $0xe8] sm:$0xff] %v862
  %879 = vst [vmem:[#allocation2 + $0xf8] sm:$0xff] %v863
  %v880 = vld [vmem:[%s3] sm:$0xff]
  %v881 = vld [vmem:[%s3 + $0x8] sm:$0xff]
  %v882 = vld [vmem:[%s3 + $0x10] sm:$0xff]
  %v883 = vld [vmem:[%s3 + $0x18] sm:$0xff]
  %v884 = vld [vmem:[%s3 + $0x20] sm:$0xff]
  %v885 = vld [vmem:[%s3 + $0x28] sm:$0xff]
  %v886 = vld [vmem:[%s3 + $0x30] sm:$0xff]
  %v887 = vld [vmem:[%s3 + $0x38] sm:$0xff]
  %v888 = vld [vmem:[%s3 + $0x40] sm:$0xff]
  %v889 = vld [vmem:[%s3 + $0x48] sm:$0xff]
  %v890 = vld [vmem:[%s3 + $0x50] sm:$0xff]
  %v891 = vld [vmem:[%s3 + $0x58] sm:$0xff]
  %v892 = vld [vmem:[%s3 + $0x60] sm:$0xff]
  %v893 = vld [vmem:[%s3 + $0x68] sm:$0xff]
  %v894 = vld [vmem:[%s3 + $0x70] sm:$0xff]
  %v895 = vld [vmem:[%s3 + $0x78] sm:$0xff]
  %v896 = vld [vmem:[#allocation2] sm:$0xff]
  %v897 = vld [vmem:[#allocation2 + $0x8] sm:$0xff]
  %v898 = vld [vmem:[#allocation2 + $0x10] sm:$0xff]
  %v899 = vld [vmem:[#allocation2 + $0x18] sm:$0xff]
  %v900 = vld [vmem:[#allocation2 + $0x20] sm:$0xff]
  %v901 = vld [vmem:[#allocation2 + $0x28] sm:$0xff]
  %v902 = vld [vmem:[#allocation2 + $0x30] sm:$0xff]
  %v903 = vld [vmem:[#allocation2 + $0x38] sm:$0xff]
  %v904 = vld [vmem:[#allocation2 + $0x40] sm:$0xff]
  %v905 = vld [vmem:[#allocation2 + $0x48] sm:$0xff]
  %v906 = vld [vmem:[#allocation2 + $0x50] sm:$0xff]
  %v907 = vld [vmem:[#allocation2 + $0x58] sm:$0xff]
  %v908 = vld [vmem:[#allocation2 + $0x60] sm:$0xff]
  %v909 = vld [vmem:[#allocation2 + $0x68] sm:$0xff]
  %v910 = vld [vmem:[#allocation2 + $0x70] sm:$0xff]
  %v911 = vld [vmem:[#allocation2 + $0x78] sm:$0xff]
  %v912 = vld [vmem:[#allocation2 + $0x80] sm:$0xff]
  %v913 = vld [vmem:[#allocation2 + $0x88] sm:$0xff]
  %v914 = vld [vmem:[#allocation2 + $0x90] sm:$0xff]
  %v915 = vld [vmem:[#allocation2 + $0x98] sm:$0xff]
  %v916 = vld [vmem:[#allocation2 + $0xa0] sm:$0xff]
  %v917 = vld [vmem:[#allocation2 + $0xa8] sm:$0xff]
  %v918 = vld [vmem:[#allocation2 + $0xb0] sm:$0xff]
  %v919 = vld [vmem:[#allocation2 + $0xb8] sm:$0xff]
  %v920 = vld [vmem:[#allocation2 + $0xc0] sm:$0xff]
  %v921 = vld [vmem:[#allocation2 + $0xc8] sm:$0xff]
  %v922 = vld [vmem:[#allocation2 + $0xd0] sm:$0xff]
  %v923 = vld [vmem:[#allocation2 + $0xd8] sm:$0xff]
  %v924 = vld [vmem:[#allocation2 + $0xe0] sm:$0xff]
  %v925 = vld [vmem:[#allocation2 + $0xe8] sm:$0xff]
  %v926 = vld [vmem:[#allocation2 + $0xf0] sm:$0xff]
  %v927 = vld [vmem:[#allocation2 + $0xf8] sm:$0xff]
  %928 = vmatprep.subr.mxu0 %v927
  %929 = vmatpush1.msra.mxu0 %v926
  %930 = vmatprep.subr.mxu0 %v925
  %931 = vmatpush1.msra.mxu0 %v924
  %932 = vmatprep.subr.mxu0 %v923
  %933 = vmatpush1.msra.mxu0 %v922
  %934 = vmatprep.subr.mxu0 %v921
  %935 = vmatpush1.msra.mxu0 %v920
  %936 = vmatprep.subr.mxu0 %v919
  %937 = vmatpush1.msra.mxu0 %v918
  %938 = vmatprep.subr.mxu0 %v917
  %939 = vmatpush1.msra.mxu0 %v916
  %940 = vmatprep.subr.mxu0 %v915
  %941 = vmatpush1.msra.mxu0 %v914
  %942 = vmatprep.subr.mxu0 %v913
  %943 = vmatpush1.msra.mxu0 %v912
  %944 = vmatprep.subr.mxu0 %v911
  %945 = vmatpush1.msra.mxu0 %v910
  %946 = vmatprep.subr.mxu0 %v909
  %947 = vmatpush1.msra.mxu0 %v908
  %948 = vmatprep.subr.mxu0 %v907
  %949 = vmatpush1.msra.mxu0 %v906
  %950 = vmatprep.subr.mxu0 %v905
  %951 = vmatpush1.msra.mxu0 %v904
  %952 = vmatprep.subr.mxu0 %v903
  %953 = vmatpush1.msra.mxu0 %v902
  %954 = vmatprep.subr.mxu0 %v901
  %955 = vmatpush1.msra.mxu0 %v900
  %956 = vmatprep.subr.mxu0 %v899
  %957 = vmatpush1.msra.mxu0 %v898
  %958 = vmatprep.subr.mxu0 %v897
  %959 = vmatpush1.msra.mxu0 %v896
  %960 = vmatprep.subr.mxu0 0.0
  %961 = vmatpush2.msra.mxu0 0.0
  %962 = vmatprep.subr.mxu0 0.0
  %963 = vmatpush2.msra.mxu0 0.0
  %964 = vmatprep.subr.mxu0 0.0
  %965 = vmatpush2.msra.mxu0 0.0
  %966 = vmatprep.subr.mxu0 0.0
  %967 = vmatpush2.msra.mxu0 0.0
  %968 = vmatprep.subr.mxu0 0.0
  %969 = vmatpush2.msra.mxu0 0.0
  %970 = vmatprep.subr.mxu0 0.0
  %971 = vmatpush2.msra.mxu0 0.0
  %972 = vmatprep.subr.mxu0 0.0
  %973 = vmatpush2.msra.mxu0 0.0
  %974 = vmatprep.subr.mxu0 0.0
  %975 = vmatpush2.msra.mxu0 0.0
  %976 = vmatprep.subr.mxu0 0.0
  %977 = vmatpush2.msra.mxu0 0.0
  %978 = vmatprep.subr.mxu0 0.0
  %979 = vmatpush2.msra.mxu0 0.0
  %980 = vmatprep.subr.mxu0 0.0
  %981 = vmatpush2.msra.mxu0 0.0
  %982 = vmatprep.subr.mxu0 0.0
  %983 = vmatpush2.msra.mxu0 0.0
  %984 = vmatprep.subr.mxu0 0.0
  %985 = vmatpush2.msra.mxu0 0.0
  %986 = vmatprep.subr.mxu0 0.0
  %987 = vmatpush2.msra.mxu0 0.0
  %988 = vmatprep.subr.mxu0 0.0
  %989 = vmatpush2.msra.mxu0 0.0
  %990 = vmatprep.subr.mxu0 0.0
  %991 = vmatpush2.msra.mxu0 0.0
  %992 = vmatprep.mubr.f32.mxu0 0.0
  %993 = vmatmul.mubr.f32.gmra.mxu0 %v880
  %v994 = vpop.f32.mrf.mxu0
  %v995 = vadd.f32 0.0, %v994
  %v996 = vpop.f32.mrf.mxu0
  %v997 = vadd.f32 0.0, %v996
  %998 = vmatprep.mubr.f32.mxu0 0.0
  %999 = vmatmul.mubr.f32.gmra.mxu0 %v881
  %v1000 = vpop.f32.mrf.mxu0
  %v1001 = vadd.f32 0.0, %v1000
  %v1002 = vpop.f32.mrf.mxu0
  %v1003 = vadd.f32 0.0, %v1002
  %1004 = vmatprep.mubr.f32.mxu0 0.0
  %1005 = vmatmul.mubr.f32.gmra.mxu0 %v882
  %v1006 = vpop.f32.mrf.mxu0
  %v1007 = vadd.f32 0.0, %v1006
  %v1008 = vpop.f32.mrf.mxu0
  %v1009 = vadd.f32 0.0, %v1008
  %1010 = vmatprep.mubr.f32.mxu0 0.0
  %1011 = vmatmul.mubr.f32.gmra.mxu0 %v883
  %v1012 = vpop.f32.mrf.mxu0
  %v1013 = vadd.f32 0.0, %v1012
  %v1014 = vpop.f32.mrf.mxu0
  %v1015 = vadd.f32 0.0, %v1014
  %1016 = vmatprep.mubr.f32.mxu0 0.0
  %1017 = vmatmul.mubr.f32.gmra.mxu0 %v884
  %v1018 = vpop.f32.mrf.mxu0
  %v1019 = vadd.f32 0.0, %v1018
  %v1020 = vpop.f32.mrf.mxu0
  %v1021 = vadd.f32 0.0, %v1020
  %1022 = vmatprep.mubr.f32.mxu0 0.0
  %1023 = vmatmul.mubr.f32.gmra.mxu0 %v885
  %v1024 = vpop.f32.mrf.mxu0
  %v1025 = vadd.f32 0.0, %v1024
  %v1026 = vpop.f32.mrf.mxu0
  %v1027 = vadd.f32 0.0, %v1026
  %1028 = vmatprep.mubr.f32.mxu0 0.0
  %1029 = vmatmul.mubr.f32.gmra.mxu0 %v886
  %v1030 = vpop.f32.mrf.mxu0
  %v1031 = vadd.f32 0.0, %v1030
  %v1032 = vpop.f32.mrf.mxu0
  %v1033 = vadd.f32 0.0, %v1032
  %1034 = vmatprep.mubr.f32.mxu0 0.0
  %1035 = vmatmul.mubr.f32.gmra.mxu0 %v887
  %v1036 = vpop.f32.mrf.mxu0
  %v1037 = vadd.f32 0.0, %v1036
  %v1038 = vpop.f32.mrf.mxu0
  %v1039 = vadd.f32 0.0, %v1038
  %1040 = vmatprep.mubr.f32.mxu0 0.0
  %1041 = vmatmul.mubr.f32.gmra.mxu0 %v888
  %v1042 = vpop.f32.mrf.mxu0
  %v1043 = vadd.f32 0.0, %v1042
  %v1044 = vpop.f32.mrf.mxu0
  %v1045 = vadd.f32 0.0, %v1044
  %1046 = vmatprep.mubr.f32.mxu0 0.0
  %1047 = vmatmul.mubr.f32.gmra.mxu0 %v889
  %v1048 = vpop.f32.mrf.mxu0
  %v1049 = vadd.f32 0.0, %v1048
  %v1050 = vpop.f32.mrf.mxu0
  %v1051 = vadd.f32 0.0, %v1050
  %1052 = vmatprep.mubr.f32.mxu0 0.0
  %1053 = vmatmul.mubr.f32.gmra.mxu0 %v890
  %v1054 = vpop.f32.mrf.mxu0
  %v1055 = vadd.f32 0.0, %v1054
  %v1056 = vpop.f32.mrf.mxu0
  %v1057 = vadd.f32 0.0, %v1056
  %1058 = vmatprep.mubr.f32.mxu0 0.0
  %1059 = vmatmul.mubr.f32.gmra.mxu0 %v891
  %v1060 = vpop.f32.mrf.mxu0
  %v1061 = vadd.f32 0.0, %v1060
  %v1062 = vpop.f32.mrf.mxu0
  %v1063 = vadd.f32 0.0, %v1062
  %1064 = vmatprep.mubr.f32.mxu0 0.0
  %1065 = vmatmul.mubr.f32.gmra.mxu0 %v892
  %v1066 = vpop.f32.mrf.mxu0
  %v1067 = vadd.f32 0.0, %v1066
  %v1068 = vpop.f32.mrf.mxu0
  %v1069 = vadd.f32 0.0, %v1068
  %1070 = vmatprep.mubr.f32.mxu0 0.0
  %1071 = vmatmul.mubr.f32.gmra.mxu0 %v893
  %v1072 = vpop.f32.mrf.mxu0
  %v1073 = vadd.f32 0.0, %v1072
  %v1074 = vpop.f32.mrf.mxu0
  %v1075 = vadd.f32 0.0, %v1074
  %1076 = vmatprep.mubr.f32.mxu0 0.0
  %1077 = vmatmul.mubr.f32.gmra.mxu0 %v894
  %v1078 = vpop.f32.mrf.mxu0
  %v1079 = vadd.f32 0.0, %v1078
  %v1080 = vpop.f32.mrf.mxu0
  %v1081 = vadd.f32 0.0, %v1080
  %1082 = vmatprep.mubr.f32.mxu0 0.0
  %1083 = vmatmul.mubr.f32.gmra.mxu0 %v895
  %v1084 = vpop.f32.mrf.mxu0
  %v1085 = vadd.f32 0.0, %v1084
  %v1086 = vpop.f32.mrf.mxu0
  %v1087 = vadd.f32 0.0, %v1086
  %1088 = vdwg.mxu0
  %1089 = vset.pattern.permute.xlu0 3
  %1090 = vperm.xlu0 %1089, %v23
  %v1091 = vpop.permute.xlu0 %1090
  %1093 = vset.pattern.permute.xlu0 3
  %1094 = vperm.xlu0 %1093, %v24
  %v1095 = vpop.permute.xlu0 %1094
  %1097 = vset.pattern.permute.xlu0 3
  %1098 = vperm.xlu0 %1097, %v25
  %v1099 = vpop.permute.xlu0 %1098
  %1101 = vset.pattern.permute.xlu0 3
  %1102 = vperm.xlu0 %1101, %v26
  %v1103 = vpop.permute.xlu0 %1102
  %1105 = vset.pattern.permute.xlu0 3
  %1106 = vperm.xlu0 %1105, %v27
  %v1107 = vpop.permute.xlu0 %1106
  %1109 = vset.pattern.permute.xlu0 3
  %1110 = vperm.xlu0 %1109, %v28
  %v1111 = vpop.permute.xlu0 %1110
  %1113 = vset.pattern.permute.xlu0 3
  %1114 = vperm.xlu0 %1113, %v29
  %v1115 = vpop.permute.xlu0 %1114
  %1117 = vset.pattern.permute.xlu0 3
  %1118 = vperm.xlu0 %1117, %v30
  %v1119 = vpop.permute.xlu0 %1118
  %1121 = vset.pattern.permute.xlu0 3
  %1122 = vperm.xlu0 %1121, %v31
  %v1123 = vpop.permute.xlu0 %1122
  %1125 = vset.pattern.permute.xlu0 3
  %1126 = vperm.xlu0 %1125, %v32
  %v1127 = vpop.permute.xlu0 %1126
  %1129 = vset.pattern.permute.xlu0 3
  %1130 = vperm.xlu0 %1129, %v33
  %v1131 = vpop.permute.xlu0 %1130
  %1133 = vset.pattern.permute.xlu0 3
  %1134 = vperm.xlu0 %1133, %v34
  %v1135 = vpop.permute.xlu0 %1134
  %1137 = vset.pattern.permute.xlu0 3
  %1138 = vperm.xlu0 %1137, %v35
  %v1139 = vpop.permute.xlu0 %1138
  %1141 = vset.pattern.permute.xlu0 3
  %1142 = vperm.xlu0 %1141, %v36
  %v1143 = vpop.permute.xlu0 %1142
  %1145 = vset.pattern.permute.xlu0 3
  %1146 = vperm.xlu0 %1145, %v37
  %v1147 = vpop.permute.xlu0 %1146
  %1149 = vset.pattern.permute.xlu0 3
  %1150 = vperm.xlu0 %1149, %v38
  %v1151 = vpop.permute.xlu0 %1150
  %v1153 = vadd.f32 %v995, %v1091
  %v1154 = vadd.f32 %v1001, %v1095
  %v1155 = vadd.f32 %v1007, %v1099
  %v1156 = vadd.f32 %v1013, %v1103
  %v1157 = vadd.f32 %v1019, %v1107
  %v1158 = vadd.f32 %v1025, %v1111
  %v1159 = vadd.f32 %v1031, %v1115
  %v1160 = vadd.f32 %v1037, %v1119
  %v1161 = vadd.f32 %v1043, %v1123
  %v1162 = vadd.f32 %v1049, %v1127
  %v1163 = vadd.f32 %v1055, %v1131
  %v1164 = vadd.f32 %v1061, %v1135
  %v1165 = vadd.f32 %v1067, %v1139
  %v1166 = vadd.f32 %v1073, %v1143
  %v1167 = vadd.f32 %v1079, %v1147
  %v1168 = vadd.f32 %v1085, %v1151
  %vm1169 = vcmp.gt.f32.partialorder %v1153, 0.0
  %vm1170 = vcmp.gt.f32.partialorder %v1154, 0.0
  %vm1171 = vcmp.gt.f32.partialorder %v1155, 0.0
  %vm1172 = vcmp.gt.f32.partialorder %v1156, 0.0
  %vm1173 = vcmp.gt.f32.partialorder %v1157, 0.0
  %vm1174 = vcmp.gt.f32.partialorder %v1158, 0.0
  %vm1175 = vcmp.gt.f32.partialorder %v1159, 0.0
  %vm1176 = vcmp.gt.f32.partialorder %v1160, 0.0
  %vm1177 = vcmp.gt.f32.partialorder %v1161, 0.0
  %vm1178 = vcmp.gt.f32.partialorder %v1162, 0.0
  %vm1179 = vcmp.gt.f32.partialorder %v1163, 0.0
  %vm1180 = vcmp.gt.f32.partialorder %v1164, 0.0
  %vm1181 = vcmp.gt.f32.partialorder %v1165, 0.0
  %vm1182 = vcmp.gt.f32.partialorder %v1166, 0.0
  %vm1183 = vcmp.gt.f32.partialorder %v1167, 0.0
  %vm1184 = vcmp.gt.f32.partialorder %v1168, 0.0
  %v1185 = vsel %vm1169, 1.0, 0.2
  %v1186 = vsel %vm1170, 1.0, 0.2
  %v1187 = vsel %vm1171, 1.0, 0.2
  %v1188 = vsel %vm1172, 1.0, 0.2
  %v1189 = vsel %vm1173, 1.0, 0.2
  %v1190 = vsel %vm1174, 1.0, 0.2
  %v1191 = vsel %vm1175, 1.0, 0.2
  %v1192 = vsel %vm1176, 1.0, 0.2
  %v1193 = vsel %vm1177, 1.0, 0.2
  %v1194 = vsel %vm1178, 1.0, 0.2
  %v1195 = vsel %vm1179, 1.0, 0.2
  %v1196 = vsel %vm1180, 1.0, 0.2
  %v1197 = vsel %vm1181, 1.0, 0.2
  %v1198 = vsel %vm1182, 1.0, 0.2
  %v1199 = vsel %vm1183, 1.0, 0.2
  %v1200 = vsel %vm1184, 1.0, 0.2
  %v1201 = vmul.f32 %v1153, %v1185
  %v1202 = vmul.f32 %v1154, %v1186
  %v1203 = vmul.f32 %v1155, %v1187
  %v1204 = vmul.f32 %v1156, %v1188
  %v1205 = vmul.f32 %v1157, %v1189
  %v1206 = vmul.f32 %v1158, %v1190
  %v1207 = vmul.f32 %v1159, %v1191
  %v1208 = vmul.f32 %v1160, %v1192
  %v1209 = vmul.f32 %v1161, %v1193
  %v1210 = vmul.f32 %v1162, %v1194
  %v1211 = vmul.f32 %v1163, %v1195
  %v1212 = vmul.f32 %v1164, %v1196
  %v1213 = vmul.f32 %v1165, %v1197
  %v1214 = vmul.f32 %v1166, %v1198
  %v1215 = vmul.f32 %v1167, %v1199
  %v1216 = vmul.f32 %v1168, %v1200
  %1217 = vst [vmem:[#allocation2] sm:$0xff] %v1201
  %1218 = vst [vmem:[#allocation2 + $0x10] sm:$0xff] %v1202
  %1219 = vst [vmem:[#allocation2 + $0x20] sm:$0xff] %v1203
  %1220 = vst [vmem:[#allocation2 + $0x30] sm:$0xff] %v1204
  %1221 = vst [vmem:[#allocation2 + $0x40] sm:$0xff] %v1205
  %1222 = vst [vmem:[#allocation2 + $0x50] sm:$0xff] %v1206
  %1223 = vst [vmem:[#allocation2 + $0x60] sm:$0xff] %v1207
  %1224 = vst [vmem:[#allocation2 + $0x70] sm:$0xff] %v1208
  %1225 = vst [vmem:[#allocation2 + $0x80] sm:$0xff] %v1209
  %1226 = vst [vmem:[#allocation2 + $0x90] sm:$0xff] %v1210
  %1227 = vst [vmem:[#allocation2 + $0xa0] sm:$0xff] %v1211
  %1228 = vst [vmem:[#allocation2 + $0xb0] sm:$0xff] %v1212
  %1229 = vst [vmem:[#allocation2 + $0xc0] sm:$0xff] %v1213
  %1230 = vst [vmem:[#allocation2 + $0xd0] sm:$0xff] %v1214
  %1231 = vst [vmem:[#allocation2 + $0xe0] sm:$0xff] %v1215
  %1232 = vst [vmem:[#allocation2 + $0xf0] sm:$0xff] %v1216
  %v1233 = vmul.f32 %v997, %v1185
  %v1234 = vmul.f32 %v1003, %v1186
  %v1235 = vmul.f32 %v1009, %v1187
  %v1236 = vmul.f32 %v1015, %v1188
  %v1237 = vmul.f32 %v1021, %v1189
  %v1238 = vmul.f32 %v1027, %v1190
  %v1239 = vmul.f32 %v1033, %v1191
  %v1240 = vmul.f32 %v1039, %v1192
  %v1241 = vmul.f32 %v1045, %v1193
  %v1242 = vmul.f32 %v1051, %v1194
  %v1243 = vmul.f32 %v1057, %v1195
  %v1244 = vmul.f32 %v1063, %v1196
  %v1245 = vmul.f32 %v1069, %v1197
  %v1246 = vmul.f32 %v1075, %v1198
  %v1247 = vmul.f32 %v1081, %v1199
  %v1248 = vmul.f32 %v1087, %v1200
  %1249 = vst [vmem:[#allocation2 + $0x8] sm:$0xff] %v1233
  %1250 = vst [vmem:[#allocation2 + $0x18] sm:$0xff] %v1234
  %1251 = vst [vmem:[#allocation2 + $0x28] sm:$0xff] %v1235
  %1252 = vst [vmem:[#allocation2 + $0x38] sm:$0xff] %v1236
  %1253 = vst [vmem:[#allocation2 + $0x48] sm:$0xff] %v1237
  %1254 = vst [vmem:[#allocation2 + $0x58] sm:$0xff] %v1238
  %1255 = vst [vmem:[#allocation2 + $0x68] sm:$0xff] %v1239
  %1256 = vst [vmem:[#allocation2 + $0x78] sm:$0xff] %v1240
  %1257 = vst [vmem:[#allocation2 + $0x88] sm:$0xff] %v1241
  %1258 = vst [vmem:[#allocation2 + $0x98] sm:$0xff] %v1242
  %1259 = vst [vmem:[#allocation2 + $0xa8] sm:$0xff] %v1243
  %1260 = vst [vmem:[#allocation2 + $0xb8] sm:$0xff] %v1244
  %1261 = vst [vmem:[#allocation2 + $0xc8] sm:$0xff] %v1245
  %1262 = vst [vmem:[#allocation2 + $0xd8] sm:$0xff] %v1246
  %1263 = vst [vmem:[#allocation2 + $0xe8] sm:$0xff] %v1247
  %1264 = vst [vmem:[#allocation2 + $0xf8] sm:$0xff] %v1248
  %v1265 = vld [vmem:[%s4] sm:$0xf]
  %v1266 = vld [vmem:[#allocation2] sm:$0xff]
  %v1267 = vld [vmem:[#allocation2 + $0x8] sm:$0xff]
  %v1268 = vld [vmem:[#allocation2 + $0x10] sm:$0xff]
  %v1269 = vld [vmem:[#allocation2 + $0x18] sm:$0xff]
  %v1270 = vld [vmem:[#allocation2 + $0x20] sm:$0xff]
  %v1271 = vld [vmem:[#allocation2 + $0x28] sm:$0xff]
  %v1272 = vld [vmem:[#allocation2 + $0x30] sm:$0xff]
  %v1273 = vld [vmem:[#allocation2 + $0x38] sm:$0xff]
  %v1274 = vld [vmem:[#allocation2 + $0x40] sm:$0xff]
  %v1275 = vld [vmem:[#allocation2 + $0x48] sm:$0xff]
  %v1276 = vld [vmem:[#allocation2 + $0x50] sm:$0xff]
  %v1277 = vld [vmem:[#allocation2 + $0x58] sm:$0xff]
  %v1278 = vld [vmem:[#allocation2 + $0x60] sm:$0xff]
  %v1279 = vld [vmem:[#allocation2 + $0x68] sm:$0xff]
  %v1280 = vld [vmem:[#allocation2 + $0x70] sm:$0xff]
  %v1281 = vld [vmem:[#allocation2 + $0x78] sm:$0xff]
  %v1282 = vld [vmem:[#allocation2 + $0x80] sm:$0xff]
  %v1283 = vld [vmem:[#allocation2 + $0x88] sm:$0xff]
  %v1284 = vld [vmem:[#allocation2 + $0x90] sm:$0xff]
  %v1285 = vld [vmem:[#allocation2 + $0x98] sm:$0xff]
  %v1286 = vld [vmem:[#allocation2 + $0xa0] sm:$0xff]
  %v1287 = vld [vmem:[#allocation2 + $0xa8] sm:$0xff]
  %v1288 = vld [vmem:[#allocation2 + $0xb0] sm:$0xff]
  %v1289 = vld [vmem:[#allocation2 + $0xb8] sm:$0xff]
  %v1290 = vld [vmem:[#allocation2 + $0xc0] sm:$0xff]
  %v1291 = vld [vmem:[#allocation2 + $0xc8] sm:$0xff]
  %v1292 = vld [vmem:[#allocation2 + $0xd0] sm:$0xff]
  %v1293 = vld [vmem:[#allocation2 + $0xd8] sm:$0xff]
  %v1294 = vld [vmem:[#allocation2 + $0xe0] sm:$0xff]
  %v1295 = vld [vmem:[#allocation2 + $0xe8] sm:$0xff]
  %v1296 = vld [vmem:[#allocation2 + $0xf0] sm:$0xff]
  %v1297 = vld [vmem:[#allocation2 + $0xf8] sm:$0xff]
  %1298 = vmatprep.subr.mxu0 %v1297
  %1299 = vmatpush1.msra.mxu0 %v1296
  %1300 = vmatprep.subr.mxu0 %v1295
  %1301 = vmatpush1.msra.mxu0 %v1294
  %1302 = vmatprep.subr.mxu0 %v1293
  %1303 = vmatpush1.msra.mxu0 %v1292
  %1304 = vmatprep.subr.mxu0 %v1291
  %1305 = vmatpush1.msra.mxu0 %v1290
  %1306 = vmatprep.subr.mxu0 %v1289
  %1307 = vmatpush1.msra.mxu0 %v1288
  %1308 = vmatprep.subr.mxu0 %v1287
  %1309 = vmatpush1.msra.mxu0 %v1286
  %1310 = vmatprep.subr.mxu0 %v1285
  %1311 = vmatpush1.msra.mxu0 %v1284
  %1312 = vmatprep.subr.mxu0 %v1283
  %1313 = vmatpush1.msra.mxu0 %v1282
  %1314 = vmatprep.subr.mxu0 %v1281
  %1315 = vmatpush1.msra.mxu0 %v1280
  %1316 = vmatprep.subr.mxu0 %v1279
  %1317 = vmatpush1.msra.mxu0 %v1278
  %1318 = vmatprep.subr.mxu0 %v1277
  %1319 = vmatpush1.msra.mxu0 %v1276
  %1320 = vmatprep.subr.mxu0 %v1275
  %1321 = vmatpush1.msra.mxu0 %v1274
  %1322 = vmatprep.subr.mxu0 %v1273
  %1323 = vmatpush1.msra.mxu0 %v1272
  %1324 = vmatprep.subr.mxu0 %v1271
  %1325 = vmatpush1.msra.mxu0 %v1270
  %1326 = vmatprep.subr.mxu0 %v1269
  %1327 = vmatpush1.msra.mxu0 %v1268
  %1328 = vmatprep.subr.mxu0 %v1267
  %1329 = vmatpush1.msra.mxu0 %v1266
  %1330 = vmatprep.subr.mxu0 0.0
  %1331 = vmatpush2.msra.mxu0 0.0
  %1332 = vmatprep.subr.mxu0 0.0
  %1333 = vmatpush2.msra.mxu0 0.0
  %1334 = vmatprep.subr.mxu0 0.0
  %1335 = vmatpush2.msra.mxu0 0.0
  %1336 = vmatprep.subr.mxu0 0.0
  %1337 = vmatpush2.msra.mxu0 0.0
  %1338 = vmatprep.subr.mxu0 0.0
  %1339 = vmatpush2.msra.mxu0 0.0
  %1340 = vmatprep.subr.mxu0 0.0
  %1341 = vmatpush2.msra.mxu0 0.0
  %1342 = vmatprep.subr.mxu0 0.0
  %1343 = vmatpush2.msra.mxu0 0.0
  %1344 = vmatprep.subr.mxu0 0.0
  %1345 = vmatpush2.msra.mxu0 0.0
  %1346 = vmatprep.subr.mxu0 0.0
  %1347 = vmatpush2.msra.mxu0 0.0
  %1348 = vmatprep.subr.mxu0 0.0
  %1349 = vmatpush2.msra.mxu0 0.0
  %1350 = vmatprep.subr.mxu0 0.0
  %1351 = vmatpush2.msra.mxu0 0.0
  %1352 = vmatprep.subr.mxu0 0.0
  %1353 = vmatpush2.msra.mxu0 0.0
  %1354 = vmatprep.subr.mxu0 0.0
  %1355 = vmatpush2.msra.mxu0 0.0
  %1356 = vmatprep.subr.mxu0 0.0
  %1357 = vmatpush2.msra.mxu0 0.0
  %1358 = vmatprep.subr.mxu0 0.0
  %1359 = vmatpush2.msra.mxu0 0.0
  %1360 = vmatprep.subr.mxu0 0.0
  %1361 = vmatpush2.msra.mxu0 0.0
  %1362 = vmatprep.mubr.f32.mxu0 0.0
  %1363 = vmatmul.mubr.f32.gmra.mxu0 %v1265
  %v1364 = vpop.f32.mrf.mxu0
  %v1365 = vadd.f32 0.0, %v1364
  %v1366 = vpop.f32.mrf.mxu0
  %v1367 = vadd.f32 0.0, %v1366
  %1368 = vdwg.mxu0
  %1369 = vset.pattern.permute.xlu0 4
  %1370 = vperm.xlu0 %1369, %v23
  %v1371 = vpop.permute.xlu0 %1370
  %v1373 = vadd.f32 %v1365, %v1371
  %1374 = vst [vmem:[%s6] sm:$0xf] %v1373
  %v1375 = vand.u32 2147483647, %v1367
  %v1376 = vlog2.pop %v1375
  %v1377 = vmul.f32 %v1376, 0.6931472
  %1378 = vst [vmem:[%s6 + $0x4] sm:$0xf] %v1377
  // Predicated region
  $region26: #{np_state_prior_forward.1} parent=0 // pred_check
    _
  $region27: #{np_state_prior_forward.1} parent=0 // pred_check_branch
    %1380 = sbr.rel (0) target = $region29
  $region28: #{np_state_prior_forward.1} parent=0 // pred_region
    _
  $region29: #{np_state_prior_forward.1} parent=0 // pred_fallthru
    _
  // Predicated region
  $region30: #{np_state_prior_forward.1} parent=0 // pred_check
    _
  $region31: #{np_state_prior_forward.1} parent=0 // pred_check_branch
    %1382 = sbr.rel (0) target = $region33
  $region32: #{np_state_prior_forward.1} parent=0 // pred_region
    _
  $region33: #{np_state_prior_forward.1} parent=0 // pred_fallthru
    _

</llo_original>
